<compile_context>
chip_gen: v5e
topology: v5e:2x2
jax: 0.10.0
libtpu: 0.0.40
codegen_flags: <defaults>
</compile_context>

<pallas_src>
import jax
import jax.numpy as jnp
from jax import lax
from jax.experimental import pallas as pl
from jax.experimental.pallas import tpu as pltpu


def _make_euler_flow_kernel(grid_size: int):
    """Kernel: s_{k+1} = s_k + flow(s_k), `grid_size` steps.

    dt is already folded into w2 / b2 by the wrapper, so the update has no
    scalar multiply. The integrated f32 state lives in the output VMEM tile.
    """

    def kernel(x_ref, w1_ref, b1_ref, w2_ref, b2_ref, out_ref):
        w1 = w1_ref[...]            # (D, Hd)  bf16
        w2 = w2_ref[...]            # (Hd, D)  bf16, pre-scaled by dt
        b1 = b1_ref[...]            # (1, Hd)  f32
        b2 = b2_ref[...]            # (1, D)   f32, pre-scaled by dt

        def flow(s):
            # 2-layer MLP: bf16 MXU operands, f32 accumulation. The (1, *)
            # biases broadcast inside the add (no full (TB, *) temp is built).
            h = jnp.tanh(
                jnp.dot(s.astype(jnp.bfloat16), w1,
                        preferred_element_type=jnp.float32) + b1)
            return jnp.dot(h.astype(jnp.bfloat16), w2,
                           preferred_element_type=jnp.float32) + b2

        # Peeled Euler step 0: compute s1 directly from the input tile instead
        # of copying x -> out and immediately re-loading it (saves one full
        # (TB, D) store + load round trip per tile).
        s0 = x_ref[...]
        out_ref[...] = s0 + flow(s0)

        def euler_step(_, carry):
            s = out_ref[...]
            out_ref[...] = s + flow(s)      # f32 Euler state in the out tile
            return carry

        # Full unroll only for short fixed trip counts; partial unroll keeps
        # instruction memory and live ranges sane for long (SDE-style) runs.
        unroll = True if grid_size <= 16 else 4
        lax.fori_loop(0, grid_size - 1, euler_step, 0, unroll=unroll)

    return kernel


def _vmem_bytes(tb: int, d: int, hidden: int) -> int:
    """Rough VMEM footprint for a batch tile of `tb` rows."""
    x_and_out = 2 * 2 * tb * d * 4          # x + out tiles, double-buffered, f32
    weights = 2 * 2 * d * hidden * 2        # W1 + W2, double-buffered, bf16
    biases = 2 * 2 * (hidden + d) * 4       # b1 + b2, f32 (tiny)
    return x_and_out + weights + biases


def _pick_batch_tile(b_pad: int, d: int, hidden: int, budget: int) -> int:
    """Prefer >= 2 tiles (v7x has 2 TensorCores), stay inside the VMEM budget,
    keep the tile sublane-aligned. (Note: the batch/M dim streams through the
    MXU; it is HIDDEN that sets MXU utilization, not TB.)"""

    def fits(tb):
        return _vmem_bytes(tb, d, hidden) <= budget

    for tb in (256, 128):
        if b_pad % tb == 0 and b_pad // tb >= 2 and fits(tb):
            return tb
    for tb in (256, 128, 64, 32, 16, 8):
        if b_pad % tb == 0 and fits(tb):
            return tb
    return 8  # last resort for very large D: smallest sublane-aligned tile


def integrated_flow(x_nchw, w1, b1, w2, b2, *, grid_size: int, T: float):
    """Euler-integrate dx/dt = MLP(x) over [0, T] with `grid_size` steps."""
    B, C, H, W = x_nchw.shape
    D = C * H * W
    hidden = w1.shape[1]
    dt = float(T) / float(grid_size)        # Python float; folded below

    x_flat = x_nchw.reshape(B, D).astype(jnp.float32)   # (B, D), lane-dense

    # MXU-friendly operands: bf16 weights, f32 biases / state / accumulation.
    # dt is folded into the second-layer weights & bias (f32 scale first, then
    # the bf16 cast), removing the per-step (TB, D) multiply from the kernel.
    w1_bf16 = w1.astype(jnp.bfloat16)
    w2_bf16 = (dt * w2.astype(jnp.float32)).astype(jnp.bfloat16)
    b1_f32 = b1.astype(jnp.float32).reshape(1, hidden)
    b2_f32 = (dt * b2.astype(jnp.float32)).reshape(1, D)

    # Pad batch up to a sublane multiple (8) so the M tile never runs masked.
    B_pad = -(-B // 8) * 8
    if B_pad != B:
        x_flat = jnp.pad(x_flat, ((0, B_pad - B), (0, 0)))

    # Budget leaves headroom under v7x's 64 MiB physical VMEM (v5e/v6e: 128 MiB).
    vmem_budget = 40 * 1024 * 1024
    TB = _pick_batch_tile(B_pad, D, hidden, vmem_budget)
    n_tiles = B_pad // TB
    vmem_limit = int(min(64 << 20, max(16 << 20, 2 * _vmem_bytes(TB, D, hidden))))

    kernel = _make_euler_flow_kernel(grid_size)

    out_flat = pl.pallas_call(
        kernel,
        out_shape=jax.ShapeDtypeStruct((B_pad, D), jnp.float32),
        grid_spec=pltpu.PrefetchScalarGridSpec(
            num_scalar_prefetch=0,
            grid=(n_tiles,),
            in_specs=[
                pl.BlockSpec((TB, D), lambda i: (i, 0)),        # x (batch-tiled)
                pl.BlockSpec(w1_bf16.shape, lambda i: (0, 0)),  # W1 (resident)
                pl.BlockSpec(b1_f32.shape, lambda i: (0, 0)),   # b1 (resident)
                pl.BlockSpec(w2_bf16.shape, lambda i: (0, 0)),  # W2 (resident, dt-scaled)
                pl.BlockSpec(b2_f32.shape, lambda i: (0, 0)),   # b2 (resident, dt-scaled)
            ],
            out_specs=pl.BlockSpec((TB, D), lambda i: (i, 0)),
        ),
        compiler_params=pltpu.CompilerParams(
            # Batch tiles are independent -> "parallel" lets multi-TC parts
            # (v7x) split the batch axis across cores.
            dimension_semantics=("parallel",),
            vmem_limit_bytes=vmem_limit,
        ),
    )(x_flat, w1_bf16, b1_f32, w2_bf16, b2_f32)

    return out_flat[:B].reshape(B, C, H, W)


if __name__ == "__main__":
    # Small shapes consistent with the module's forward (image-like state).
    B, C, H, W = 2, 4, 16, 16
    D = C * H * W            # 1024 -> lane-aligned
    HIDDEN = 128
    GRID_SIZE = 8
    T = 1.0

    key = jax.random.PRNGKey(0)
    kx, k1, k2, k3, k4 = jax.random.split(key, 5)

    x = jax.random.normal(kx, (B, C, H, W), dtype=jnp.float32)

    # Deterministic flow_fn (2-layer MLP) parameters.
    w1 = jax.random.normal(k1, (D, HIDDEN), dtype=jnp.float32) * (1.0 / jnp.sqrt(D))
    b1 = jax.random.normal(k2, (1, HIDDEN), dtype=jnp.float32) * 0.01
    w2 = jax.random.normal(k3, (HIDDEN, D), dtype=jnp.float32) * (1.0 / jnp.sqrt(HIDDEN))
    b2 = jax.random.normal(k4, (1, D), dtype=jnp.float32) * 0.01

    out = integrated_flow(x, w1, b1, w2, b2, grid_size=GRID_SIZE, T=T)
    out = jax.block_until_ready(out)

    # Pure-JAX reference with the identical precision policy (dt folded into
    # the bf16 W2 / f32 b2, bf16 MXU operands, f32 accumulation / f32 state).
    def ref_fn(x0):
        dt = T / GRID_SIZE
        s = x0.reshape(B, D).astype(jnp.float32)
        w1b = w1.astype(jnp.bfloat16)
        w2b = (dt * w2).astype(jnp.bfloat16)
        b2s = dt * b2
        for _ in range(GRID_SIZE):
            h = jnp.tanh(jnp.dot(s.astype(jnp.bfloat16), w1b,
                                 preferred_element_type=jnp.float32) + b1)
            s = s + jnp.dot(h.astype(jnp.bfloat16), w2b,
                            preferred_element_type=jnp.float32) + b2s
        return s.reshape(B, C, H, W)

    ref = jax.block_until_ready(ref_fn(x))
    assert out.shape == (B, C, H, W)
    assert jnp.allclose(out, ref, atol=2e-3, rtol=2e-3), (
        float(jnp.max(jnp.abs(out - ref))))

    print("KERNEL_OK")
</pallas_src>

<mosaic_0001>
module attributes {stable_mosaic.version = 11 : i64} {
  func.func @kernel(%arg0: i32, %arg1: memref<8x1024xf32, #tpu.memory_space<vmem>>, %arg2: memref<1024x128xbf16, #tpu.memory_space<vmem>>, %arg3: memref<1x128xf32, #tpu.memory_space<vmem>>, %arg4: memref<128x1024xbf16, #tpu.memory_space<vmem>>, %arg5: memref<1x1024xf32, #tpu.memory_space<vmem>>, %arg6: memref<8x1024xf32, #tpu.memory_space<vmem>>) attributes {dimension_semantics = [#tpu.dimension_semantics<parallel>], iteration_bounds = array<i64: 1>, scalar_prefetch = 0 : i64, scratch_operands = 0 : i64, tpu.core_type = #tpu.core_type<tc>, window_params = [{transform_indices = @transform_0, window_bounds = array<i64: 8, 1024>}, {pipeline_mode = #tpu.pipeline_mode<synchronous>, transform_indices = @transform_1, window_bounds = array<i64: 1024, 128>}, {pipeline_mode = #tpu.pipeline_mode<synchronous>, transform_indices = @transform_2, window_bounds = array<i64: 1, 128>}, {pipeline_mode = #tpu.pipeline_mode<synchronous>, transform_indices = @transform_3, window_bounds = array<i64: 128, 1024>}, {pipeline_mode = #tpu.pipeline_mode<synchronous>, transform_indices = @transform_4, window_bounds = array<i64: 1, 1024>}, {transform_indices = @transform_5, window_bounds = array<i64: 8, 1024>}]} {
    %c0 = arith.constant 0 : index
    %c0_0 = arith.constant 0 : index
    %0 = vector.load %arg2[%c0, %c0_0] : memref<1024x128xbf16, #tpu.memory_space<vmem>>, vector<1024x128xbf16>
    %c0_1 = arith.constant 0 : index
    %c0_2 = arith.constant 0 : index
    %1 = vector.load %arg4[%c0_1, %c0_2] : memref<128x1024xbf16, #tpu.memory_space<vmem>>, vector<128x1024xbf16>
    %c0_3 = arith.constant 0 : index
    %c0_4 = arith.constant 0 : index
    %2 = vector.load %arg3[%c0_3, %c0_4] : memref<1x128xf32, #tpu.memory_space<vmem>>, vector<1x128xf32>
    %c0_5 = arith.constant 0 : index
    %c0_6 = arith.constant 0 : index
    %3 = vector.load %arg5[%c0_5, %c0_6] : memref<1x1024xf32, #tpu.memory_space<vmem>>, vector<1x1024xf32>
    %c0_7 = arith.constant 0 : index
    %c0_8 = arith.constant 0 : index
    %4 = vector.load %arg1[%c0_7, %c0_8] : memref<8x1024xf32, #tpu.memory_space<vmem>>, vector<8x1024xf32>
    %5 = arith.truncf %4 : vector<8x1024xf32> to vector<8x1024xbf16>
    %cst = arith.constant dense<0.000000e+00> : vector<8x128xf32>
    %6 = tpu.matmul %5, %0, %cst {dimension_numbers = #tpu.dot_dimension_numbers<[1], [0], [0], [1], [0, 0, 1, 1], [], []>} : vector<8x1024xbf16>, vector<1024x128xbf16>, vector<8x128xf32> -> vector<8x128xf32>
    %7 = vector.broadcast %2 : vector<1x128xf32> to vector<8x128xf32>
    %8 = arith.addf %6, %7 : vector<8x128xf32>
    %9 = math.tanh %8 : vector<8x128xf32>
    %10 = arith.truncf %9 : vector<8x128xf32> to vector<8x128xbf16>
    %cst_9 = arith.constant dense<0.000000e+00> : vector<8x1024xf32>
    %11 = tpu.matmul %10, %1, %cst_9 {dimension_numbers = #tpu.dot_dimension_numbers<[1], [0], [0], [1], [0, 0, 1, 1], [], []>} : vector<8x128xbf16>, vector<128x1024xbf16>, vector<8x1024xf32> -> vector<8x1024xf32>
    %12 = vector.broadcast %3 : vector<1x1024xf32> to vector<8x1024xf32>
    %13 = arith.addf %11, %12 : vector<8x1024xf32>
    %14 = arith.addf %4, %13 : vector<8x1024xf32>
    %c0_10 = arith.constant 0 : index
    %c0_11 = arith.constant 0 : index
    %15 = vector.load %arg6[%c0_10, %c0_11] : memref<8x1024xf32, #tpu.memory_space<vmem>>, vector<8x1024xf32>
    tpu.vector_store %arg6[%c0_10, %c0_11], %14 {strides = array<i32>} : memref<8x1024xf32, #tpu.memory_space<vmem>>, vector<8x1024xf32>,
    %c0_i32 = arith.constant 0 : i32
    %c0_12 = arith.constant 0 : index
    %c0_13 = arith.constant 0 : index
    %16 = vector.load %arg6[%c0_12, %c0_13] : memref<8x1024xf32, #tpu.memory_space<vmem>>, vector<8x1024xf32>
    %17 = arith.truncf %16 : vector<8x1024xf32> to vector<8x1024xbf16>
    %cst_14 = arith.constant dense<0.000000e+00> : vector<8x128xf32>
    %18 = tpu.matmul %17, %0, %cst_14 {dimension_numbers = #tpu.dot_dimension_numbers<[1], [0], [0], [1], [0, 0, 1, 1], [], []>} : vector<8x1024xbf16>, vector<1024x128xbf16>, vector<8x128xf32> -> vector<8x128xf32>
    %19 = vector.broadcast %2 : vector<1x128xf32> to vector<8x128xf32>
    %20 = arith.addf %18, %19 : vector<8x128xf32>
    %21 = math.tanh %20 : vector<8x128xf32>
    %22 = arith.truncf %21 : vector<8x128xf32> to vector<8x128xbf16>
    %cst_15 = arith.constant dense<0.000000e+00> : vector<8x1024xf32>
    %23 = tpu.matmul %22, %1, %cst_15 {dimension_numbers = #tpu.dot_dimension_numbers<[1], [0], [0], [1], [0, 0, 1, 1], [], []>} : vector<8x128xbf16>, vector<128x1024xbf16>, vector<8x1024xf32> -> vector<8x1024xf32>
    %24 = vector.broadcast %3 : vector<1x1024xf32> to vector<8x1024xf32>
    %25 = arith.addf %23, %24 : vector<8x1024xf32>
    %26 = arith.addf %16, %25 : vector<8x1024xf32>
    %c0_16 = arith.constant 0 : index
    %c0_17 = arith.constant 0 : index
    %27 = vector.load %arg6[%c0_16, %c0_17] : memref<8x1024xf32, #tpu.memory_space<vmem>>, vector<8x1024xf32>
    tpu.vector_store %arg6[%c0_16, %c0_17], %26 {strides = array<i32>} : memref<8x1024xf32, #tpu.memory_space<vmem>>, vector<8x1024xf32>,
    %c1_i32 = arith.constant 1 : i32
    %c0_18 = arith.constant 0 : index
    %c0_19 = arith.constant 0 : index
    %28 = vector.load %arg6[%c0_18, %c0_19] : memref<8x1024xf32, #tpu.memory_space<vmem>>, vector<8x1024xf32>
    %29 = arith.truncf %28 : vector<8x1024xf32> to vector<8x1024xbf16>
    %cst_20 = arith.constant dense<0.000000e+00> : vector<8x128xf32>
    %30 = tpu.matmul %29, %0, %cst_20 {dimension_numbers = #tpu.dot_dimension_numbers<[1], [0], [0], [1], [0, 0, 1, 1], [], []>} : vector<8x1024xbf16>, vector<1024x128xbf16>, vector<8x128xf32> -> vector<8x128xf32>
    %31 = vector.broadcast %2 : vector<1x128xf32> to vector<8x128xf32>
    %32 = arith.addf %30, %31 : vector<8x128xf32>
    %33 = math.tanh %32 : vector<8x128xf32>
    %34 = arith.truncf %33 : vector<8x128xf32> to vector<8x128xbf16>
    %cst_21 = arith.constant dense<0.000000e+00> : vector<8x1024xf32>
    %35 = tpu.matmul %34, %1, %cst_21 {dimension_numbers = #tpu.dot_dimension_numbers<[1], [0], [0], [1], [0, 0, 1, 1], [], []>} : vector<8x128xbf16>, vector<128x1024xbf16>, vector<8x1024xf32> -> vector<8x1024xf32>
    %36 = vector.broadcast %3 : vector<1x1024xf32> to vector<8x1024xf32>
    %37 = arith.addf %35, %36 : vector<8x1024xf32>
    %38 = arith.addf %28, %37 : vector<8x1024xf32>
    %c0_22 = arith.constant 0 : index
    %c0_23 = arith.constant 0 : index
    %39 = vector.load %arg6[%c0_22, %c0_23] : memref<8x1024xf32, #tpu.memory_space<vmem>>, vector<8x1024xf32>
    tpu.vector_store %arg6[%c0_22, %c0_23], %38 {strides = array<i32>} : memref<8x1024xf32, #tpu.memory_space<vmem>>, vector<8x1024xf32>,
    %c2_i32 = arith.constant 2 : i32
    %c0_24 = arith.constant 0 : index
    %c0_25 = arith.constant 0 : index
    %40 = vector.load %arg6[%c0_24, %c0_25] : memref<8x1024xf32, #tpu.memory_space<vmem>>, vector<8x1024xf32>
    %41 = arith.truncf %40 : vector<8x1024xf32> to vector<8x1024xbf16>
    %cst_26 = arith.constant dense<0.000000e+00> : vector<8x128xf32>
    %42 = tpu.matmul %41, %0, %cst_26 {dimension_numbers = #tpu.dot_dimension_numbers<[1], [0], [0], [1], [0, 0, 1, 1], [], []>} : vector<8x1024xbf16>, vector<1024x128xbf16>, vector<8x128xf32> -> vector<8x128xf32>
    %43 = vector.broadcast %2 : vector<1x128xf32> to vector<8x128xf32>
    %44 = arith.addf %42, %43 : vector<8x128xf32>
    %45 = math.tanh %44 : vector<8x128xf32>
    %46 = arith.truncf %45 : vector<8x128xf32> to vector<8x128xbf16>
    %cst_27 = arith.constant dense<0.000000e+00> : vector<8x1024xf32>
    %47 = tpu.matmul %46, %1, %cst_27 {dimension_numbers = #tpu.dot_dimension_numbers<[1], [0], [0], [1], [0, 0, 1, 1], [], []>} : vector<8x128xbf16>, vector<128x1024xbf16>, vector<8x1024xf32> -> vector<8x1024xf32>
    %48 = vector.broadcast %3 : vector<1x1024xf32> to vector<8x1024xf32>
    %49 = arith.addf %47, %48 : vector<8x1024xf32>
    %50 = arith.addf %40, %49 : vector<8x1024xf32>
    %c0_28 = arith.constant 0 : index
    %c0_29 = arith.constant 0 : index
    %51 = vector.load %arg6[%c0_28, %c0_29] : memref<8x1024xf32, #tpu.memory_space<vmem>>, vector<8x1024xf32>
    tpu.vector_store %arg6[%c0_28, %c0_29], %50 {strides = array<i32>} : memref<8x1024xf32, #tpu.memory_space<vmem>>, vector<8x1024xf32>,
    %c3_i32 = arith.constant 3 : i32
    %c0_30 = arith.constant 0 : index
    %c0_31 = arith.constant 0 : index
    %52 = vector.load %arg6[%c0_30, %c0_31] : memref<8x1024xf32, #tpu.memory_space<vmem>>, vector<8x1024xf32>
    %53 = arith.truncf %52 : vector<8x1024xf32> to vector<8x1024xbf16>
    %cst_32 = arith.constant dense<0.000000e+00> : vector<8x128xf32>
    %54 = tpu.matmul %53, %0, %cst_32 {dimension_numbers = #tpu.dot_dimension_numbers<[1], [0], [0], [1], [0, 0, 1, 1], [], []>} : vector<8x1024xbf16>, vector<1024x128xbf16>, vector<8x128xf32> -> vector<8x128xf32>
    %55 = vector.broadcast %2 : vector<1x128xf32> to vector<8x128xf32>
    %56 = arith.addf %54, %55 : vector<8x128xf32>
    %57 = math.tanh %56 : vector<8x128xf32>
    %58 = arith.truncf %57 : vector<8x128xf32> to vector<8x128xbf16>
    %cst_33 = arith.constant dense<0.000000e+00> : vector<8x1024xf32>
    %59 = tpu.matmul %58, %1, %cst_33 {dimension_numbers = #tpu.dot_dimension_numbers<[1], [0], [0], [1], [0, 0, 1, 1], [], []>} : vector<8x128xbf16>, vector<128x1024xbf16>, vector<8x1024xf32> -> vector<8x1024xf32>
    %60 = vector.broadcast %3 : vector<1x1024xf32> to vector<8x1024xf32>
    %61 = arith.addf %59, %60 : vector<8x1024xf32>
    %62 = arith.addf %52, %61 : vector<8x1024xf32>
    %c0_34 = arith.constant 0 : index
    %c0_35 = arith.constant 0 : index
    %63 = vector.load %arg6[%c0_34, %c0_35] : memref<8x1024xf32, #tpu.memory_space<vmem>>, vector<8x1024xf32>
    tpu.vector_store %arg6[%c0_34, %c0_35], %62 {strides = array<i32>} : memref<8x1024xf32, #tpu.memory_space<vmem>>, vector<8x1024xf32>,
    %c4_i32 = arith.constant 4 : i32
    %c0_36 = arith.constant 0 : index
    %c0_37 = arith.constant 0 : index
    %64 = vector.load %arg6[%c0_36, %c0_37] : memref<8x1024xf32, #tpu.memory_space<vmem>>, vector<8x1024xf32>
    %65 = arith.truncf %64 : vector<8x1024xf32> to vector<8x1024xbf16>
    %cst_38 = arith.constant dense<0.000000e+00> : vector<8x128xf32>
    %66 = tpu.matmul %65, %0, %cst_38 {dimension_numbers = #tpu.dot_dimension_numbers<[1], [0], [0], [1], [0, 0, 1, 1], [], []>} : vector<8x1024xbf16>, vector<1024x128xbf16>, vector<8x128xf32> -> vector<8x128xf32>
    %67 = vector.broadcast %2 : vector<1x128xf32> to vector<8x128xf32>
    %68 = arith.addf %66, %67 : vector<8x128xf32>
    %69 = math.tanh %68 : vector<8x128xf32>
    %70 = arith.truncf %69 : vector<8x128xf32> to vector<8x128xbf16>
    %cst_39 = arith.constant dense<0.000000e+00> : vector<8x1024xf32>
    %71 = tpu.matmul %70, %1, %cst_39 {dimension_numbers = #tpu.dot_dimension_numbers<[1], [0], [0], [1], [0, 0, 1, 1], [], []>} : vector<8x128xbf16>, vector<128x1024xbf16>, vector<8x1024xf32> -> vector<8x1024xf32>
    %72 = vector.broadcast %3 : vector<1x1024xf32> to vector<8x1024xf32>
    %73 = arith.addf %71, %72 : vector<8x1024xf32>
    %74 = arith.addf %64, %73 : vector<8x1024xf32>
    %c0_40 = arith.constant 0 : index
    %c0_41 = arith.constant 0 : index
    %75 = vector.load %arg6[%c0_40, %c0_41] : memref<8x1024xf32, #tpu.memory_space<vmem>>, vector<8x1024xf32>
    tpu.vector_store %arg6[%c0_40, %c0_41], %74 {strides = array<i32>} : memref<8x1024xf32, #tpu.memory_space<vmem>>, vector<8x1024xf32>,
    %c5_i32 = arith.constant 5 : i32
    %c0_42 = arith.constant 0 : index
    %c0_43 = arith.constant 0 : index
    %76 = vector.load %arg6[%c0_42, %c0_43] : memref<8x1024xf32, #tpu.memory_space<vmem>>, vector<8x1024xf32>
    %77 = arith.truncf %76 : vector<8x1024xf32> to vector<8x1024xbf16>
    %cst_44 = arith.constant dense<0.000000e+00> : vector<8x128xf32>
    %78 = tpu.matmul %77, %0, %cst_44 {dimension_numbers = #tpu.dot_dimension_numbers<[1], [0], [0], [1], [0, 0, 1, 1], [], []>} : vector<8x1024xbf16>, vector<1024x128xbf16>, vector<8x128xf32> -> vector<8x128xf32>
    %79 = vector.broadcast %2 : vector<1x128xf32> to vector<8x128xf32>
    %80 = arith.addf %78, %79 : vector<8x128xf32>
    %81 = math.tanh %80 : vector<8x128xf32>
    %82 = arith.truncf %81 : vector<8x128xf32> to vector<8x128xbf16>
    %cst_45 = arith.constant dense<0.000000e+00> : vector<8x1024xf32>
    %83 = tpu.matmul %82, %1, %cst_45 {dimension_numbers = #tpu.dot_dimension_numbers<[1], [0], [0], [1], [0, 0, 1, 1], [], []>} : vector<8x128xbf16>, vector<128x1024xbf16>, vector<8x1024xf32> -> vector<8x1024xf32>
    %84 = vector.broadcast %3 : vector<1x1024xf32> to vector<8x1024xf32>
    %85 = arith.addf %83, %84 : vector<8x1024xf32>
    %86 = arith.addf %76, %85 : vector<8x1024xf32>
    %c0_46 = arith.constant 0 : index
    %c0_47 = arith.constant 0 : index
    %87 = vector.load %arg6[%c0_46, %c0_47] : memref<8x1024xf32, #tpu.memory_space<vmem>>, vector<8x1024xf32>
    tpu.vector_store %arg6[%c0_46, %c0_47], %86 {strides = array<i32>} : memref<8x1024xf32, #tpu.memory_space<vmem>>, vector<8x1024xf32>,
    %c6_i32 = arith.constant 6 : i32
    %c0_48 = arith.constant 0 : index
    %c0_49 = arith.constant 0 : index
    %88 = vector.load %arg6[%c0_48, %c0_49] : memref<8x1024xf32, #tpu.memory_space<vmem>>, vector<8x1024xf32>
    %89 = arith.truncf %88 : vector<8x1024xf32> to vector<8x1024xbf16>
    %cst_50 = arith.constant dense<0.000000e+00> : vector<8x128xf32>
    %90 = tpu.matmul %89, %0, %cst_50 {dimension_numbers = #tpu.dot_dimension_numbers<[1], [0], [0], [1], [0, 0, 1, 1], [], []>} : vector<8x1024xbf16>, vector<1024x128xbf16>, vector<8x128xf32> -> vector<8x128xf32>
    %91 = vector.broadcast %2 : vector<1x128xf32> to vector<8x128xf32>
    %92 = arith.addf %90, %91 : vector<8x128xf32>
    %93 = math.tanh %92 : vector<8x128xf32>
    %94 = arith.truncf %93 : vector<8x128xf32> to vector<8x128xbf16>
    %cst_51 = arith.constant dense<0.000000e+00> : vector<8x1024xf32>
    %95 = tpu.matmul %94, %1, %cst_51 {dimension_numbers = #tpu.dot_dimension_numbers<[1], [0], [0], [1], [0, 0, 1, 1], [], []>} : vector<8x128xbf16>, vector<128x1024xbf16>, vector<8x1024xf32> -> vector<8x1024xf32>
    %96 = vector.broadcast %3 : vector<1x1024xf32> to vector<8x1024xf32>
    %97 = arith.addf %95, %96 : vector<8x1024xf32>
    %98 = arith.addf %88, %97 : vector<8x1024xf32>
    %c0_52 = arith.constant 0 : index
    %c0_53 = arith.constant 0 : index
    %99 = vector.load %arg6[%c0_52, %c0_53] : memref<8x1024xf32, #tpu.memory_space<vmem>>, vector<8x1024xf32>
    tpu.vector_store %arg6[%c0_52, %c0_53], %98 {strides = array<i32>} : memref<8x1024xf32, #tpu.memory_space<vmem>>, vector<8x1024xf32>,
    return
  }
  func.func @transform_0(%arg0: i32) -> (i32, i32) {
    %c0_i32 = arith.constant 0 : i32
    %c0_i32_0 = arith.constant 0 : i32
    return %arg0, %c0_i32 : i32, i32
  }
  func.func @transform_1(%arg0: i32) -> (i32, i32) {
    %c0_i32 = arith.constant 0 : i32
    %c0_i32_0 = arith.constant 0 : i32
    %c0_i32_1 = arith.constant 0 : i32
    return %c0_i32, %c0_i32_0 : i32, i32
  }
  func.func @transform_2(%arg0: i32) -> (i32, i32) {
    %c0_i32 = arith.constant 0 : i32
    %c0_i32_0 = arith.constant 0 : i32
    %c0_i32_1 = arith.constant 0 : i32
    return %c0_i32, %c0_i32_0 : i32, i32
  }
  func.func @transform_3(%arg0: i32) -> (i32, i32) {
    %c0_i32 = arith.constant 0 : i32
    %c0_i32_0 = arith.constant 0 : i32
    %c0_i32_1 = arith.constant 0 : i32
    return %c0_i32, %c0_i32_0 : i32, i32
  }
  func.func @transform_4(%arg0: i32) -> (i32, i32) {
    %c0_i32 = arith.constant 0 : i32
    %c0_i32_0 = arith.constant 0 : i32
    %c0_i32_1 = arith.constant 0 : i32
    return %c0_i32, %c0_i32_0 : i32, i32
  }
  func.func @transform_5(%arg0: i32) -> (i32, i32) {
    %c0_i32 = arith.constant 0 : i32
    %c0_i32_0 = arith.constant 0 : i32
    return %arg0, %c0_i32 : i32, i32
  }
}

</mosaic_0001>

<llo_original>
// kernel: tpu_custom_call.1
$region0: #{tpu_custom_call.1}
  #allocation0 [shape = 'u32[]', space=smem, size = 0x4, offset = 0x4, fixed_abs, tag = 'smem constant byte address 0x4 - core index']
  #allocation1 [shape = 'u32[72,128]{1,0:T(1,128)}', space=vmem, size = 0x9000, scoped, tag = 'internal scratch']
  %s0 = inlined_call_operand.hbm [shape: f32[8,1024], index: 0, kind: input, shape index: {}]
  %s1 = inlined_call_operand.hbm [shape: bf16[1024,128], index: 1, kind: input, shape index: {}]
  %s2 = inlined_call_operand.vmem [shape: f32[1,128], index: 2, kind: input, shape index: {}]
  %s3 = inlined_call_operand.hbm [shape: bf16[128,1024], index: 3, kind: input, shape index: {}]
  %s4 = inlined_call_operand.hbm [shape: f32[1,1024], index: 4, kind: input, shape index: {}]
  %s5 = inlined_call_operand.hbm [shape: f32[8,1024], index: 5, kind: output, shape index: {}]
  %s6 = sld [smem:[#allocation0]]
  $region46: #{tpu_custom_call.1} parent=0
    _
  %s8 = ssub.s32 1, %s6
  %s9 = scalar_select 0, %s8, %s6
  $region1: #{tpu_custom_call.1} parent=0
    #allocation2 [shape = 'u8[32768]{0}', space=vmem, size = 0x8000, scoped, tag = 'input window, operand 0, single buffered']
    #allocation3 [shape = 's32[1]{0}', space=sflag, size = 0x4, scoped, tag = 'scoped memory for tpu_custom_call.1']
    #allocation4 [shape = 's32[1]{0}', space=sflag, size = 0x4, scoped, tag = 'scoped memory for tpu_custom_call.1']
    #allocation5 [shape = 'u8[262144]{0}', space=vmem, size = 0x40000, scoped, tag = 'input window, operand 1, single buffered']
    #allocation6 [shape = 's32[1]{0}', space=sflag, size = 0x4, scoped, tag = 'scoped memory for tpu_custom_call.1']
    #allocation7 [shape = 'u8[262144]{0}', space=vmem, size = 0x40000, scoped, tag = 'input window, operand 3, single buffered']
    #allocation8 [shape = 'u8[4096]{0}', space=vmem, size = 0x1000, scoped, tag = 'input window, operand 4, single buffered']
    #allocation9 [shape = 's32[1]{0}', space=sflag, size = 0x4, scoped, tag = 'scoped memory for tpu_custom_call.1']
    #allocation10 [shape = 'u8[32768]{0}', space=vmem, size = 0x8000, scoped, tag = 'output window, operand 0, single buffered']
    %10 = vsyncpa [#allocation3], 0
    %11 = vsyncpa [#allocation6], 0
    %12 = vsyncpa [#allocation9], 0
    %13 = vsyncpa [#allocation4], 0
    // Predicated region
    $region2: #{tpu_custom_call.1} parent=1 // pred_check
      _
    $region3: #{tpu_custom_call.1} parent=1 // pred_check_branch
      %15 = sbr.rel (0) target = $region5
    $region4: #{tpu_custom_call.1} parent=1 // pred_region
      %17 = vsyncadd [#allocation3], 0
      %s19 = sshll.u32 %s0, 4
      %s20 = int_to_ptr.hbm [resolvable:$true] %s19
      %s21 = sshll.u32 [#allocation2], 4
      %s22 = int_to_ptr.vmem [resolvable:$true] %s21
      %24 = dma.hbm_to_vmem [thread:$0]  %s20, 1024, %s22, [#allocation3]
    $region5: #{tpu_custom_call.1} parent=1 // pred_fallthru
      _
    // Predicated region
    $region6: #{tpu_custom_call.1} parent=1 // pred_check
      _
    $region7: #{tpu_custom_call.1} parent=1 // pred_check_branch
      %26 = sbr.rel (0) target = $region9
    $region8: #{tpu_custom_call.1} parent=1 // pred_region
      %28 = vsyncadd [#allocation6], 0
      %s29 = sshll.u32 %s1, 4
      %s30 = int_to_ptr.hbm [resolvable:$true] %s29
      %s31 = sshll.u32 [#allocation5], 4
      %s32 = int_to_ptr.vmem [resolvable:$true] %s31
      %37 = dma.hbm_to_vmem [thread:$0]  %s30, 8192, %s32, [#allocation6], 64, 64, 4
    $region9: #{tpu_custom_call.1} parent=1 // pred_fallthru
      _
    // Predicated region
    $region10: #{tpu_custom_call.1} parent=1 // pred_check
      _
    $region11: #{tpu_custom_call.1} parent=1 // pred_check_branch
      %39 = sbr.rel (0) target = $region13
    $region12: #{tpu_custom_call.1} parent=1 // pred_region
      _
    $region13: #{tpu_custom_call.1} parent=1 // pred_fallthru
      _
    // Predicated region
    $region14: #{tpu_custom_call.1} parent=1 // pred_check
      _
    $region15: #{tpu_custom_call.1} parent=1 // pred_check_branch
      %41 = sbr.rel (0) target = $region17
    $region16: #{tpu_custom_call.1} parent=1 // pred_region
      %43 = vsyncadd [#allocation6], 0
      %s44 = sshll.u32 %s3, 4
      %s45 = int_to_ptr.hbm [resolvable:$true] %s44
      %s46 = sshll.u32 [#allocation7], 4
      %s47 = int_to_ptr.vmem [resolvable:$true] %s46
      %52 = dma.hbm_to_vmem [thread:$0]  %s45, 8192, %s47, [#allocation6], 512, 512, 32
    $region17: #{tpu_custom_call.1} parent=1 // pred_fallthru
      _
    // Predicated region
    $region18: #{tpu_custom_call.1} parent=1 // pred_check
      _
    $region19: #{tpu_custom_call.1} parent=1 // pred_check_branch
      %54 = sbr.rel (0) target = $region21
    $region20: #{tpu_custom_call.1} parent=1 // pred_region
      %56 = vsyncadd [#allocation9], 0
      %s58 = sshll.u32 %s4, 4
      %s59 = int_to_ptr.hbm [resolvable:$true] %s58
      %s60 = sshll.u32 [#allocation8], 4
      %s61 = int_to_ptr.vmem [resolvable:$true] %s60
      %63 = dma.hbm_to_vmem [thread:$0]  %s59, 128, %s61, [#allocation9]
    $region21: #{tpu_custom_call.1} parent=1 // pred_fallthru
      _
    // Predicated region
    $region22: #{tpu_custom_call.1} parent=1 // pred_check
      _
    $region23: #{tpu_custom_call.1} parent=1 // pred_check_branch
      %65 = sbr.rel (0) target = $region25
    $region24: #{tpu_custom_call.1} parent=1 // pred_region
      %67 = dma.done [#allocation3], 1024
    $region25: #{tpu_custom_call.1} parent=1 // pred_fallthru
      _
    // Predicated region
    $region26: #{tpu_custom_call.1} parent=1 // pred_check
      _
    $region27: #{tpu_custom_call.1} parent=1 // pred_check_branch
      %69 = sbr.rel (0) target = $region29
    $region28: #{tpu_custom_call.1} parent=1 // pred_region
      %71 = dma.done [#allocation6], 8192
    $region29: #{tpu_custom_call.1} parent=1 // pred_fallthru
      _
    // Predicated region
    $region30: #{tpu_custom_call.1} parent=1 // pred_check
      _
    $region31: #{tpu_custom_call.1} parent=1 // pred_check_branch
      %73 = sbr.rel (0) target = $region33
    $region32: #{tpu_custom_call.1} parent=1 // pred_region
      %75 = dma.done [#allocation6], 8192
    $region33: #{tpu_custom_call.1} parent=1 // pred_fallthru
      _
    // Predicated region
    $region34: #{tpu_custom_call.1} parent=1 // pred_check
      _
    $region35: #{tpu_custom_call.1} parent=1 // pred_check_branch
      %77 = sbr.rel (0) target = $region37
    $region36: #{tpu_custom_call.1} parent=1 // pred_region
      %79 = dma.done [#allocation9], 128
    $region37: #{tpu_custom_call.1} parent=1 // pred_fallthru
      _
    %v80 = vld [vmem:[#allocation5] sm:$0xf]
    %v81 = vld [vmem:[#allocation5 + $0x4] sm:$0xf]
    %v82 = vld [vmem:[#allocation5 + $0x8] sm:$0xf]
    %v83 = vld [vmem:[#allocation5 + $0xc] sm:$0xf]
    %v84 = vld [vmem:[#allocation5 + $0x10] sm:$0xf]
    %v85 = vld [vmem:[#allocation5 + $0x14] sm:$0xf]
    %v86 = vld [vmem:[#allocation5 + $0x18] sm:$0xf]
    %v87 = vld [vmem:[#allocation5 + $0x1c] sm:$0xf]
    %v88 = vld [vmem:[#allocation5 + $0x20] sm:$0xf]
    %v89 = vld [vmem:[#allocation5 + $0x24] sm:$0xf]
    %v90 = vld [vmem:[#allocation5 + $0x28] sm:$0xf]
    %v91 = vld [vmem:[#allocation5 + $0x2c] sm:$0xf]
    %v92 = vld [vmem:[#allocation5 + $0x30] sm:$0xf]
    %v93 = vld [vmem:[#allocation5 + $0x34] sm:$0xf]
    %v94 = vld [vmem:[#allocation5 + $0x38] sm:$0xf]
    %v95 = vld [vmem:[#allocation5 + $0x3c] sm:$0xf]
    %v96 = vld [vmem:[#allocation5 + $0x40] sm:$0xf]
    %v97 = vld [vmem:[#allocation5 + $0x44] sm:$0xf]
    %v98 = vld [vmem:[#allocation5 + $0x48] sm:$0xf]
    %v99 = vld [vmem:[#allocation5 + $0x4c] sm:$0xf]
    %v100 = vld [vmem:[#allocation5 + $0x50] sm:$0xf]
    %v101 = vld [vmem:[#allocation5 + $0x54] sm:$0xf]
    %v102 = vld [vmem:[#allocation5 + $0x58] sm:$0xf]
    %v103 = vld [vmem:[#allocation5 + $0x5c] sm:$0xf]
    %v104 = vld [vmem:[#allocation5 + $0x60] sm:$0xf]
    %v105 = vld [vmem:[#allocation5 + $0x64] sm:$0xf]
    %v106 = vld [vmem:[#allocation5 + $0x68] sm:$0xf]
    %v107 = vld [vmem:[#allocation5 + $0x6c] sm:$0xf]
    %v108 = vld [vmem:[#allocation5 + $0x70] sm:$0xf]
    %v109 = vld [vmem:[#allocation5 + $0x74] sm:$0xf]
    %v110 = vld [vmem:[#allocation5 + $0x78] sm:$0xf]
    %v111 = vld [vmem:[#allocation5 + $0x7c] sm:$0xf]
    %v112 = vld [vmem:[#allocation5 + $0x80] sm:$0xf]
    %v113 = vld [vmem:[#allocation5 + $0x84] sm:$0xf]
    %v114 = vld [vmem:[#allocation5 + $0x88] sm:$0xf]
    %v115 = vld [vmem:[#allocation5 + $0x8c] sm:$0xf]
    %v116 = vld [vmem:[#allocation5 + $0x90] sm:$0xf]
    %v117 = vld [vmem:[#allocation5 + $0x94] sm:$0xf]
    %v118 = vld [vmem:[#allocation5 + $0x98] sm:$0xf]
    %v119 = vld [vmem:[#allocation5 + $0x9c] sm:$0xf]
    %v120 = vld [vmem:[#allocation5 + $0xa0] sm:$0xf]
    %v121 = vld [vmem:[#allocation5 + $0xa4] sm:$0xf]
    %v122 = vld [vmem:[#allocation5 + $0xa8] sm:$0xf]
    %v123 = vld [vmem:[#allocation5 + $0xac] sm:$0xf]
    %v124 = vld [vmem:[#allocation5 + $0xb0] sm:$0xf]
    %v125 = vld [vmem:[#allocation5 + $0xb4] sm:$0xf]
    %v126 = vld [vmem:[#allocation5 + $0xb8] sm:$0xf]
    %v127 = vld [vmem:[#allocation5 + $0xbc] sm:$0xf]
    %v128 = vld [vmem:[#allocation5 + $0xc0] sm:$0xf]
    %v129 = vld [vmem:[#allocation5 + $0xc4] sm:$0xf]
    %v130 = vld [vmem:[#allocation5 + $0xc8] sm:$0xf]
    %v131 = vld [vmem:[#allocation5 + $0xcc] sm:$0xf]
    %v132 = vld [vmem:[#allocation5 + $0xd0] sm:$0xf]
    %v133 = vld [vmem:[#allocation5 + $0xd4] sm:$0xf]
    %v134 = vld [vmem:[#allocation5 + $0xd8] sm:$0xf]
    %v135 = vld [vmem:[#allocation5 + $0xdc] sm:$0xf]
    %v136 = vld [vmem:[#allocation5 + $0xe0] sm:$0xf]
    %v137 = vld [vmem:[#allocation5 + $0xe4] sm:$0xf]
    %v138 = vld [vmem:[#allocation5 + $0xe8] sm:$0xf]
    %v139 = vld [vmem:[#allocation5 + $0xec] sm:$0xf]
    %v140 = vld [vmem:[#allocation5 + $0xf0] sm:$0xf]
    %v141 = vld [vmem:[#allocation5 + $0xf4] sm:$0xf]
    %v142 = vld [vmem:[#allocation5 + $0xf8] sm:$0xf]
    %v143 = vld [vmem:[#allocation5 + $0xfc] sm:$0xf]
    %v144 = vld [vmem:[#allocation5 + $0x100] sm:$0xf]
    %v145 = vld [vmem:[#allocation5 + $0x104] sm:$0xf]
    %v146 = vld [vmem:[#allocation5 + $0x108] sm:$0xf]
    %v147 = vld [vmem:[#allocation5 + $0x10c] sm:$0xf]
    %v148 = vld [vmem:[#allocation5 + $0x110] sm:$0xf]
    %v149 = vld [vmem:[#allocation5 + $0x114] sm:$0xf]
    %v150 = vld [vmem:[#allocation5 + $0x118] sm:$0xf]
    %v151 = vld [vmem:[#allocation5 + $0x11c] sm:$0xf]
    %v152 = vld [vmem:[#allocation5 + $0x120] sm:$0xf]
    %v153 = vld [vmem:[#allocation5 + $0x124] sm:$0xf]
    %v154 = vld [vmem:[#allocation5 + $0x128] sm:$0xf]
    %v155 = vld [vmem:[#allocation5 + $0x12c] sm:$0xf]
    %v156 = vld [vmem:[#allocation5 + $0x130] sm:$0xf]
    %v157 = vld [vmem:[#allocation5 + $0x134] sm:$0xf]
    %v158 = vld [vmem:[#allocation5 + $0x138] sm:$0xf]
    %v159 = vld [vmem:[#allocation5 + $0x13c] sm:$0xf]
    %v160 = vld [vmem:[#allocation5 + $0x140] sm:$0xf]
    %v161 = vld [vmem:[#allocation5 + $0x144] sm:$0xf]
    %v162 = vld [vmem:[#allocation5 + $0x148] sm:$0xf]
    %v163 = vld [vmem:[#allocation5 + $0x14c] sm:$0xf]
    %v164 = vld [vmem:[#allocation5 + $0x150] sm:$0xf]
    %v165 = vld [vmem:[#allocation5 + $0x154] sm:$0xf]
    %v166 = vld [vmem:[#allocation5 + $0x158] sm:$0xf]
    %v167 = vld [vmem:[#allocation5 + $0x15c] sm:$0xf]
    %v168 = vld [vmem:[#allocation5 + $0x160] sm:$0xf]
    %v169 = vld [vmem:[#allocation5 + $0x164] sm:$0xf]
    %v170 = vld [vmem:[#allocation5 + $0x168] sm:$0xf]
    %v171 = vld [vmem:[#allocation5 + $0x16c] sm:$0xf]
    %v172 = vld [vmem:[#allocation5 + $0x170] sm:$0xf]
    %v173 = vld [vmem:[#allocation5 + $0x174] sm:$0xf]
    %v174 = vld [vmem:[#allocation5 + $0x178] sm:$0xf]
    %v175 = vld [vmem:[#allocation5 + $0x17c] sm:$0xf]
    %v176 = vld [vmem:[#allocation5 + $0x180] sm:$0xf]
    %v177 = vld [vmem:[#allocation5 + $0x184] sm:$0xf]
    %v178 = vld [vmem:[#allocation5 + $0x188] sm:$0xf]
    %v179 = vld [vmem:[#allocation5 + $0x18c] sm:$0xf]
    %v180 = vld [vmem:[#allocation5 + $0x190] sm:$0xf]
    %v181 = vld [vmem:[#allocation5 + $0x194] sm:$0xf]
    %v182 = vld [vmem:[#allocation5 + $0x198] sm:$0xf]
    %v183 = vld [vmem:[#allocation5 + $0x19c] sm:$0xf]
    %v184 = vld [vmem:[#allocation5 + $0x1a0] sm:$0xf]
    %v185 = vld [vmem:[#allocation5 + $0x1a4] sm:$0xf]
    %v186 = vld [vmem:[#allocation5 + $0x1a8] sm:$0xf]
    %v187 = vld [vmem:[#allocation5 + $0x1ac] sm:$0xf]
    %v188 = vld [vmem:[#allocation5 + $0x1b0] sm:$0xf]
    %v189 = vld [vmem:[#allocation5 + $0x1b4] sm:$0xf]
    %v190 = vld [vmem:[#allocation5 + $0x1b8] sm:$0xf]
    %v191 = vld [vmem:[#allocation5 + $0x1bc] sm:$0xf]
    %v192 = vld [vmem:[#allocation5 + $0x1c0] sm:$0xf]
    %v193 = vld [vmem:[#allocation5 + $0x1c4] sm:$0xf]
    %v194 = vld [vmem:[#allocation5 + $0x1c8] sm:$0xf]
    %v195 = vld [vmem:[#allocation5 + $0x1cc] sm:$0xf]
    %v196 = vld [vmem:[#allocation5 + $0x1d0] sm:$0xf]
    %v197 = vld [vmem:[#allocation5 + $0x1d4] sm:$0xf]
    %v198 = vld [vmem:[#allocation5 + $0x1d8] sm:$0xf]
    %v199 = vld [vmem:[#allocation5 + $0x1dc] sm:$0xf]
    %v200 = vld [vmem:[#allocation5 + $0x1e0] sm:$0xf]
    %v201 = vld [vmem:[#allocation5 + $0x1e4] sm:$0xf]
    %v202 = vld [vmem:[#allocation5 + $0x1e8] sm:$0xf]
    %v203 = vld [vmem:[#allocation5 + $0x1ec] sm:$0xf]
    %v204 = vld [vmem:[#allocation5 + $0x1f0] sm:$0xf]
    %v205 = vld [vmem:[#allocation5 + $0x1f4] sm:$0xf]
    %v206 = vld [vmem:[#allocation5 + $0x1f8] sm:$0xf]
    %v207 = vld [vmem:[#allocation5 + $0x1fc] sm:$0xf]
    %v208 = vld [vmem:[#allocation7] sm:$0xff]
    %v209 = vld [vmem:[#allocation7 + $0x8] sm:$0xff]
    %v210 = vld [vmem:[#allocation7 + $0x10] sm:$0xff]
    %v211 = vld [vmem:[#allocation7 + $0x18] sm:$0xff]
    %v212 = vld [vmem:[#allocation7 + $0x20] sm:$0xff]
    %v213 = vld [vmem:[#allocation7 + $0x28] sm:$0xff]
    %v214 = vld [vmem:[#allocation7 + $0x30] sm:$0xff]
    %v215 = vld [vmem:[#allocation7 + $0x38] sm:$0xff]
    %v216 = vld [vmem:[#allocation7 + $0x40] sm:$0xff]
    %v217 = vld [vmem:[#allocation7 + $0x48] sm:$0xff]
    %v218 = vld [vmem:[#allocation7 + $0x50] sm:$0xff]
    %v219 = vld [vmem:[#allocation7 + $0x58] sm:$0xff]
    %v220 = vld [vmem:[#allocation7 + $0x60] sm:$0xff]
    %v221 = vld [vmem:[#allocation7 + $0x68] sm:$0xff]
    %v222 = vld [vmem:[#allocation7 + $0x70] sm:$0xff]
    %v223 = vld [vmem:[#allocation7 + $0x78] sm:$0xff]
    %v224 = vld [vmem:[#allocation7 + $0x80] sm:$0xff]
    %v225 = vld [vmem:[#allocation7 + $0x88] sm:$0xff]
    %v226 = vld [vmem:[#allocation7 + $0x90] sm:$0xff]
    %v227 = vld [vmem:[#allocation7 + $0x98] sm:$0xff]
    %v228 = vld [vmem:[#allocation7 + $0xa0] sm:$0xff]
    %v229 = vld [vmem:[#allocation7 + $0xa8] sm:$0xff]
    %v230 = vld [vmem:[#allocation7 + $0xb0] sm:$0xff]
    %v231 = vld [vmem:[#allocation7 + $0xb8] sm:$0xff]
    %v232 = vld [vmem:[#allocation7 + $0xc0] sm:$0xff]
    %v233 = vld [vmem:[#allocation7 + $0xc8] sm:$0xff]
    %v234 = vld [vmem:[#allocation7 + $0xd0] sm:$0xff]
    %v235 = vld [vmem:[#allocation7 + $0xd8] sm:$0xff]
    %v236 = vld [vmem:[#allocation7 + $0xe0] sm:$0xff]
    %v237 = vld [vmem:[#allocation7 + $0xe8] sm:$0xff]
    %v238 = vld [vmem:[#allocation7 + $0xf0] sm:$0xff]
    %v239 = vld [vmem:[#allocation7 + $0xf8] sm:$0xff]
    %v240 = vld [vmem:[#allocation7 + $0x100] sm:$0xff]
    %v241 = vld [vmem:[#allocation7 + $0x108] sm:$0xff]
    %v242 = vld [vmem:[#allocation7 + $0x110] sm:$0xff]
    %v243 = vld [vmem:[#allocation7 + $0x118] sm:$0xff]
    %v244 = vld [vmem:[#allocation7 + $0x120] sm:$0xff]
    %v245 = vld [vmem:[#allocation7 + $0x128] sm:$0xff]
    %v246 = vld [vmem:[#allocation7 + $0x130] sm:$0xff]
    %v247 = vld [vmem:[#allocation7 + $0x138] sm:$0xff]
    %v248 = vld [vmem:[#allocation7 + $0x140] sm:$0xff]
    %v249 = vld [vmem:[#allocation7 + $0x148] sm:$0xff]
    %v250 = vld [vmem:[#allocation7 + $0x150] sm:$0xff]
    %v251 = vld [vmem:[#allocation7 + $0x158] sm:$0xff]
    %v252 = vld [vmem:[#allocation7 + $0x160] sm:$0xff]
    %v253 = vld [vmem:[#allocation7 + $0x168] sm:$0xff]
    %v254 = vld [vmem:[#allocation7 + $0x170] sm:$0xff]
    %v255 = vld [vmem:[#allocation7 + $0x178] sm:$0xff]
    %v256 = vld [vmem:[#allocation7 + $0x180] sm:$0xff]
    %v257 = vld [vmem:[#allocation7 + $0x188] sm:$0xff]
    %v258 = vld [vmem:[#allocation7 + $0x190] sm:$0xff]
    %v259 = vld [vmem:[#allocation7 + $0x198] sm:$0xff]
    %v260 = vld [vmem:[#allocation7 + $0x1a0] sm:$0xff]
    %v261 = vld [vmem:[#allocation7 + $0x1a8] sm:$0xff]
    %v262 = vld [vmem:[#allocation7 + $0x1b0] sm:$0xff]
    %v263 = vld [vmem:[#allocation7 + $0x1b8] sm:$0xff]
    %v264 = vld [vmem:[#allocation7 + $0x1c0] sm:$0xff]
    %v265 = vld [vmem:[#allocation7 + $0x1c8] sm:$0xff]
    %v266 = vld [vmem:[#allocation7 + $0x1d0] sm:$0xff]
    %v267 = vld [vmem:[#allocation7 + $0x1d8] sm:$0xff]
    %v268 = vld [vmem:[#allocation7 + $0x1e0] sm:$0xff]
    %v269 = vld [vmem:[#allocation7 + $0x1e8] sm:$0xff]
    %v270 = vld [vmem:[#allocation7 + $0x1f0] sm:$0xff]
    %v271 = vld [vmem:[#allocation7 + $0x1f8] sm:$0xff]
    %v272 = vld [vmem:[%s2] sm:$0x1]
    %v273 = vld [vmem:[#allocation8] sm:$0xff]
    %v274 = vld [vmem:[#allocation2] sm:$0xff]
    %v275 = vld [vmem:[#allocation2 + $0x8] sm:$0xff]
    %v276 = vld [vmem:[#allocation2 + $0x10] sm:$0xff]
    %v277 = vld [vmem:[#allocation2 + $0x18] sm:$0xff]
    %v278 = vld [vmem:[#allocation2 + $0x20] sm:$0xff]
    %v279 = vld [vmem:[#allocation2 + $0x28] sm:$0xff]
    %v280 = vld [vmem:[#allocation2 + $0x30] sm:$0xff]
    %v281 = vld [vmem:[#allocation2 + $0x38] sm:$0xff]
    %v282 = vpack.c.bf16 %v274, %v274
    %v283 = vpack.c.bf16 %v275, %v275
    %v284 = vpack.c.bf16 %v276, %v276
    %v285 = vpack.c.bf16 %v277, %v277
    %v286 = vpack.c.bf16 %v278, %v278
    %v287 = vpack.c.bf16 %v279, %v279
    %v288 = vpack.c.bf16 %v280, %v280
    %v289 = vpack.c.bf16 %v281, %v281
    %v291 = vperm.slane %v272, 0
    %v421 = vunpack.c.l.b16 %v80
    %v422 = vunpack.c.l.b16 %v81
    %v423 = vunpack.c.l.b16 %v82
    %v424 = vunpack.c.l.b16 %v83
    %v425 = vunpack.c.l.b16 %v84
    %v426 = vunpack.c.l.b16 %v85
    %v427 = vunpack.c.l.b16 %v86
    %v428 = vunpack.c.l.b16 %v87
    %v429 = vunpack.c.l.b16 %v88
    %v430 = vunpack.c.l.b16 %v89
    %v431 = vunpack.c.l.b16 %v90
    %v432 = vunpack.c.l.b16 %v91
    %v433 = vunpack.c.l.b16 %v92
    %v434 = vunpack.c.l.b16 %v93
    %v435 = vunpack.c.l.b16 %v94
    %v436 = vunpack.c.l.b16 %v95
    %v437 = vunpack.c.l.b16 %v96
    %v438 = vunpack.c.l.b16 %v97
    %v439 = vunpack.c.l.b16 %v98
    %v440 = vunpack.c.l.b16 %v99
    %v441 = vunpack.c.l.b16 %v100
    %v442 = vunpack.c.l.b16 %v101
    %v443 = vunpack.c.l.b16 %v102
    %v444 = vunpack.c.l.b16 %v103
    %v445 = vunpack.c.l.b16 %v104
    %v446 = vunpack.c.l.b16 %v105
    %v447 = vunpack.c.l.b16 %v106
    %v448 = vunpack.c.l.b16 %v107
    %v449 = vunpack.c.l.b16 %v108
    %v450 = vunpack.c.l.b16 %v109
    %v451 = vunpack.c.l.b16 %v110
    %v452 = vunpack.c.l.b16 %v111
    %v453 = vunpack.c.l.b16 %v112
    %v454 = vunpack.c.l.b16 %v113
    %v455 = vunpack.c.l.b16 %v114
    %v456 = vunpack.c.l.b16 %v115
    %v457 = vunpack.c.l.b16 %v116
    %v458 = vunpack.c.l.b16 %v117
    %v459 = vunpack.c.l.b16 %v118
    %v460 = vunpack.c.l.b16 %v119
    %v461 = vunpack.c.l.b16 %v120
    %v462 = vunpack.c.l.b16 %v121
    %v463 = vunpack.c.l.b16 %v122
    %v464 = vunpack.c.l.b16 %v123
    %v465 = vunpack.c.l.b16 %v124
    %v466 = vunpack.c.l.b16 %v125
    %v467 = vunpack.c.l.b16 %v126
    %v468 = vunpack.c.l.b16 %v127
    %v469 = vunpack.c.l.b16 %v128
    %v470 = vunpack.c.l.b16 %v129
    %v471 = vunpack.c.l.b16 %v130
    %v472 = vunpack.c.l.b16 %v131
    %v473 = vunpack.c.l.b16 %v132
    %v474 = vunpack.c.l.b16 %v133
    %v475 = vunpack.c.l.b16 %v134
    %v476 = vunpack.c.l.b16 %v135
    %v477 = vunpack.c.l.b16 %v136
    %v478 = vunpack.c.l.b16 %v137
    %v479 = vunpack.c.l.b16 %v138
    %v480 = vunpack.c.l.b16 %v139
    %v481 = vunpack.c.l.b16 %v140
    %v482 = vunpack.c.l.b16 %v141
    %v483 = vunpack.c.l.b16 %v142
    %v484 = vunpack.c.l.b16 %v143
    %v485 = vunpack.c.l.b16 %v144
    %v486 = vunpack.c.l.b16 %v145
    %v487 = vunpack.c.l.b16 %v146
    %v488 = vunpack.c.l.b16 %v147
    %v489 = vunpack.c.l.b16 %v148
    %v490 = vunpack.c.l.b16 %v149
    %v491 = vunpack.c.l.b16 %v150
    %v492 = vunpack.c.l.b16 %v151
    %v493 = vunpack.c.l.b16 %v152
    %v494 = vunpack.c.l.b16 %v153
    %v495 = vunpack.c.l.b16 %v154
    %v496 = vunpack.c.l.b16 %v155
    %v497 = vunpack.c.l.b16 %v156
    %v498 = vunpack.c.l.b16 %v157
    %v499 = vunpack.c.l.b16 %v158
    %v500 = vunpack.c.l.b16 %v159
    %v501 = vunpack.c.l.b16 %v160
    %v502 = vunpack.c.l.b16 %v161
    %v503 = vunpack.c.l.b16 %v162
    %v504 = vunpack.c.l.b16 %v163
    %v505 = vunpack.c.l.b16 %v164
    %v506 = vunpack.c.l.b16 %v165
    %v507 = vunpack.c.l.b16 %v166
    %v508 = vunpack.c.l.b16 %v167
    %v509 = vunpack.c.l.b16 %v168
    %v510 = vunpack.c.l.b16 %v169
    %v511 = vunpack.c.l.b16 %v170
    %v512 = vunpack.c.l.b16 %v171
    %v513 = vunpack.c.l.b16 %v172
    %v514 = vunpack.c.l.b16 %v173
    %v515 = vunpack.c.l.b16 %v174
    %v516 = vunpack.c.l.b16 %v175
    %v517 = vunpack.c.l.b16 %v176
    %v518 = vunpack.c.l.b16 %v177
    %v519 = vunpack.c.l.b16 %v178
    %v520 = vunpack.c.l.b16 %v179
    %v521 = vunpack.c.l.b16 %v180
    %v522 = vunpack.c.l.b16 %v181
    %v523 = vunpack.c.l.b16 %v182
    %v524 = vunpack.c.l.b16 %v183
    %v525 = vunpack.c.l.b16 %v184
    %v526 = vunpack.c.l.b16 %v185
    %v527 = vunpack.c.l.b16 %v186
    %v528 = vunpack.c.l.b16 %v187
    %v529 = vunpack.c.l.b16 %v188
    %v530 = vunpack.c.l.b16 %v189
    %v531 = vunpack.c.l.b16 %v190
    %v532 = vunpack.c.l.b16 %v191
    %v533 = vunpack.c.l.b16 %v192
    %v534 = vunpack.c.l.b16 %v193
    %v535 = vunpack.c.l.b16 %v194
    %v536 = vunpack.c.l.b16 %v195
    %v537 = vunpack.c.l.b16 %v196
    %v538 = vunpack.c.l.b16 %v197
    %v539 = vunpack.c.l.b16 %v198
    %v540 = vunpack.c.l.b16 %v199
    %v541 = vunpack.c.l.b16 %v200
    %v542 = vunpack.c.l.b16 %v201
    %v543 = vunpack.c.l.b16 %v202
    %v544 = vunpack.c.l.b16 %v203
    %v545 = vunpack.c.l.b16 %v204
    %v546 = vunpack.c.l.b16 %v205
    %v547 = vunpack.c.l.b16 %v206
    %v548 = vunpack.c.l.b16 %v207
    %v549 = vpack.c.b16 %v422, %v421
    %v550 = vpack.c.b16 %v424, %v423
    %v551 = vpack.c.b16 %v426, %v425
    %v552 = vpack.c.b16 %v428, %v427
    %v553 = vpack.c.b16 %v430, %v429
    %v554 = vpack.c.b16 %v432, %v431
    %v555 = vpack.c.b16 %v434, %v433
    %v556 = vpack.c.b16 %v436, %v435
    %v557 = vpack.c.b16 %v438, %v437
    %v558 = vpack.c.b16 %v440, %v439
    %v559 = vpack.c.b16 %v442, %v441
    %v560 = vpack.c.b16 %v444, %v443
    %v561 = vpack.c.b16 %v446, %v445
    %v562 = vpack.c.b16 %v448, %v447
    %v563 = vpack.c.b16 %v450, %v449
    %v564 = vpack.c.b16 %v452, %v451
    %v565 = vpack.c.b16 %v454, %v453
    %v566 = vpack.c.b16 %v456, %v455
    %v567 = vpack.c.b16 %v458, %v457
    %v568 = vpack.c.b16 %v460, %v459
    %v569 = vpack.c.b16 %v462, %v461
    %v570 = vpack.c.b16 %v464, %v463
    %v571 = vpack.c.b16 %v466, %v465
    %v572 = vpack.c.b16 %v468, %v467
    %v573 = vpack.c.b16 %v470, %v469
    %v574 = vpack.c.b16 %v472, %v471
    %v575 = vpack.c.b16 %v474, %v473
    %v576 = vpack.c.b16 %v476, %v475
    %v577 = vpack.c.b16 %v478, %v477
    %v578 = vpack.c.b16 %v480, %v479
    %v579 = vpack.c.b16 %v482, %v481
    %v580 = vpack.c.b16 %v484, %v483
    %v581 = vpack.c.b16 %v486, %v485
    %v582 = vpack.c.b16 %v488, %v487
    %v583 = vpack.c.b16 %v490, %v489
    %v584 = vpack.c.b16 %v492, %v491
    %v585 = vpack.c.b16 %v494, %v493
    %v586 = vpack.c.b16 %v496, %v495
    %v587 = vpack.c.b16 %v498, %v497
    %v588 = vpack.c.b16 %v500, %v499
    %v589 = vpack.c.b16 %v502, %v501
    %v590 = vpack.c.b16 %v504, %v503
    %v591 = vpack.c.b16 %v506, %v505
    %v592 = vpack.c.b16 %v508, %v507
    %v593 = vpack.c.b16 %v510, %v509
    %v594 = vpack.c.b16 %v512, %v511
    %v595 = vpack.c.b16 %v514, %v513
    %v596 = vpack.c.b16 %v516, %v515
    %v597 = vpack.c.b16 %v518, %v517
    %v598 = vpack.c.b16 %v520, %v519
    %v599 = vpack.c.b16 %v522, %v521
    %v600 = vpack.c.b16 %v524, %v523
    %v601 = vpack.c.b16 %v526, %v525
    %v602 = vpack.c.b16 %v528, %v527
    %v603 = vpack.c.b16 %v530, %v529
    %v604 = vpack.c.b16 %v532, %v531
    %v605 = vpack.c.b16 %v534, %v533
    %v606 = vpack.c.b16 %v536, %v535
    %v607 = vpack.c.b16 %v538, %v537
    %v608 = vpack.c.b16 %v540, %v539
    %v609 = vpack.c.b16 %v542, %v541
    %v610 = vpack.c.b16 %v544, %v543
    %v611 = vpack.c.b16 %v546, %v545
    %v612 = vpack.c.b16 %v548, %v547
    %677 = vmatpush.bf16.msra.mxu0 %v556
    %678 = vmatpush.bf16.msra.mxu0 %v555
    %679 = vmatpush.bf16.msra.mxu0 %v554
    %680 = vmatpush.bf16.msra.mxu0 %v553
    %681 = vmatpush.bf16.msra.mxu0 %v552
    %682 = vmatpush.bf16.msra.mxu0 %v551
    %683 = vmatpush.bf16.msra.mxu0 %v550
    %684 = vmatpush.bf16.msra.mxu0 %v549
    %685 = vmatmul.bf16.gmra.mxu0 %v282
    %v686 = vpop.f32.mrf.mxu0
    %v687 = vadd.f32 %v291, %v686
    %v688 = vpop.f32.mrf.mxu0
    %689 = vdwg.mxu0
    %690 = vmatpush.bf16.msra.mxu0 %v564
    %691 = vmatpush.bf16.msra.mxu0 %v563
    %692 = vmatpush.bf16.msra.mxu0 %v562
    %693 = vmatpush.bf16.msra.mxu0 %v561
    %694 = vmatpush.bf16.msra.mxu0 %v560
    %695 = vmatpush.bf16.msra.mxu0 %v559
    %696 = vmatpush.bf16.msra.mxu0 %v558
    %697 = vmatpush.bf16.msra.mxu0 %v557
    %698 = vmatmul.bf16.gmra.mxu0 %v283
    %v699 = vpop.f32.mrf.mxu0
    %v700 = vadd.f32 %v687, %v699
    %v701 = vpop.f32.mrf.mxu0
    %702 = vdwg.mxu0
    %703 = vmatpush.bf16.msra.mxu0 %v572
    %704 = vmatpush.bf16.msra.mxu0 %v571
    %705 = vmatpush.bf16.msra.mxu0 %v570
    %706 = vmatpush.bf16.msra.mxu0 %v569
    %707 = vmatpush.bf16.msra.mxu0 %v568
    %708 = vmatpush.bf16.msra.mxu0 %v567
    %709 = vmatpush.bf16.msra.mxu0 %v566
    %710 = vmatpush.bf16.msra.mxu0 %v565
    %711 = vmatmul.bf16.gmra.mxu0 %v284
    %v712 = vpop.f32.mrf.mxu0
    %v713 = vadd.f32 %v700, %v712
    %v714 = vpop.f32.mrf.mxu0
    %715 = vdwg.mxu0
    %716 = vmatpush.bf16.msra.mxu0 %v580
    %717 = vmatpush.bf16.msra.mxu0 %v579
    %718 = vmatpush.bf16.msra.mxu0 %v578
    %719 = vmatpush.bf16.msra.mxu0 %v577
    %720 = vmatpush.bf16.msra.mxu0 %v576
    %721 = vmatpush.bf16.msra.mxu0 %v575
    %722 = vmatpush.bf16.msra.mxu0 %v574
    %723 = vmatpush.bf16.msra.mxu0 %v573
    %724 = vmatmul.bf16.gmra.mxu0 %v285
    %v725 = vpop.f32.mrf.mxu0
    %v726 = vadd.f32 %v713, %v725
    %v727 = vpop.f32.mrf.mxu0
    %728 = vdwg.mxu0
    %729 = vmatpush.bf16.msra.mxu0 %v588
    %730 = vmatpush.bf16.msra.mxu0 %v587
    %731 = vmatpush.bf16.msra.mxu0 %v586
    %732 = vmatpush.bf16.msra.mxu0 %v585
    %733 = vmatpush.bf16.msra.mxu0 %v584
    %734 = vmatpush.bf16.msra.mxu0 %v583
    %735 = vmatpush.bf16.msra.mxu0 %v582
    %736 = vmatpush.bf16.msra.mxu0 %v581
    %737 = vmatmul.bf16.gmra.mxu0 %v286
    %v738 = vpop.f32.mrf.mxu0
    %v739 = vadd.f32 %v726, %v738
    %v740 = vpop.f32.mrf.mxu0
    %741 = vdwg.mxu0
    %742 = vmatpush.bf16.msra.mxu0 %v596
    %743 = vmatpush.bf16.msra.mxu0 %v595
    %744 = vmatpush.bf16.msra.mxu0 %v594
    %745 = vmatpush.bf16.msra.mxu0 %v593
    %746 = vmatpush.bf16.msra.mxu0 %v592
    %747 = vmatpush.bf16.msra.mxu0 %v591
    %748 = vmatpush.bf16.msra.mxu0 %v590
    %749 = vmatpush.bf16.msra.mxu0 %v589
    %750 = vmatmul.bf16.gmra.mxu0 %v287
    %v751 = vpop.f32.mrf.mxu0
    %v752 = vadd.f32 %v739, %v751
    %v753 = vpop.f32.mrf.mxu0
    %754 = vdwg.mxu0
    %755 = vmatpush.bf16.msra.mxu0 %v604
    %756 = vmatpush.bf16.msra.mxu0 %v603
    %757 = vmatpush.bf16.msra.mxu0 %v602
    %758 = vmatpush.bf16.msra.mxu0 %v601
    %759 = vmatpush.bf16.msra.mxu0 %v600
    %760 = vmatpush.bf16.msra.mxu0 %v599
    %761 = vmatpush.bf16.msra.mxu0 %v598
    %762 = vmatpush.bf16.msra.mxu0 %v597
    %763 = vmatmul.bf16.gmra.mxu0 %v288
    %v764 = vpop.f32.mrf.mxu0
    %v765 = vadd.f32 %v752, %v764
    %v766 = vpop.f32.mrf.mxu0
    %767 = vdwg.mxu0
    %768 = vmatpush.bf16.msra.mxu0 %v612
    %769 = vmatpush.bf16.msra.mxu0 %v611
    %770 = vmatpush.bf16.msra.mxu0 %v610
    %771 = vmatpush.bf16.msra.mxu0 %v609
    %772 = vmatpush.bf16.msra.mxu0 %v608
    %773 = vmatpush.bf16.msra.mxu0 %v607
    %774 = vmatpush.bf16.msra.mxu0 %v606
    %775 = vmatpush.bf16.msra.mxu0 %v605
    %776 = vmatmul.bf16.gmra.mxu0 %v289
    %v777 = vpop.f32.mrf.mxu0
    %v778 = vadd.f32 %v765, %v777
    %v779 = vpop.f32.mrf.mxu0
    %780 = vdwg.mxu0
    %v781 = vtanh.pop %v778
    %v782 = vpack.c.bf16 %v781, %v781
    %v784 = vperm.slane %v273, 0
    %v785 = vperm.slane %v273, 1
    %v786 = vperm.slane %v273, 2
    %v787 = vperm.slane %v273, 3
    %v788 = vperm.slane %v273, 4
    %v789 = vperm.slane %v273, 5
    %v790 = vperm.slane %v273, 6
    %v791 = vperm.slane %v273, 7
    %v864 = vunpack.c.l.b16 %v208
    %v865 = vunpack.c.h.b16 %v208
    %v866 = vunpack.c.l.b16 %v209
    %v867 = vunpack.c.h.b16 %v209
    %v868 = vunpack.c.l.b16 %v210
    %v869 = vunpack.c.h.b16 %v210
    %v870 = vunpack.c.l.b16 %v211
    %v871 = vunpack.c.h.b16 %v211
    %v872 = vunpack.c.l.b16 %v212
    %v873 = vunpack.c.h.b16 %v212
    %v874 = vunpack.c.l.b16 %v213
    %v875 = vunpack.c.h.b16 %v213
    %v876 = vunpack.c.l.b16 %v214
    %v877 = vunpack.c.h.b16 %v214
    %v878 = vunpack.c.l.b16 %v215
    %v879 = vunpack.c.h.b16 %v215
    %v880 = vunpack.c.l.b16 %v216
    %v881 = vunpack.c.h.b16 %v216
    %v882 = vunpack.c.l.b16 %v217
    %v883 = vunpack.c.h.b16 %v217
    %v884 = vunpack.c.l.b16 %v218
    %v885 = vunpack.c.h.b16 %v218
    %v886 = vunpack.c.l.b16 %v219
    %v887 = vunpack.c.h.b16 %v219
    %v888 = vunpack.c.l.b16 %v220
    %v889 = vunpack.c.h.b16 %v220
    %v890 = vunpack.c.l.b16 %v221
    %v891 = vunpack.c.h.b16 %v221
    %v892 = vunpack.c.l.b16 %v222
    %v893 = vunpack.c.h.b16 %v222
    %v894 = vunpack.c.l.b16 %v223
    %v895 = vunpack.c.h.b16 %v223
    %v896 = vunpack.c.l.b16 %v224
    %v897 = vunpack.c.h.b16 %v224
    %v898 = vunpack.c.l.b16 %v225
    %v899 = vunpack.c.h.b16 %v225
    %v900 = vunpack.c.l.b16 %v226
    %v901 = vunpack.c.h.b16 %v226
    %v902 = vunpack.c.l.b16 %v227
    %v903 = vunpack.c.h.b16 %v227
    %v904 = vunpack.c.l.b16 %v228
    %v905 = vunpack.c.h.b16 %v228
    %v906 = vunpack.c.l.b16 %v229
    %v907 = vunpack.c.h.b16 %v229
    %v908 = vunpack.c.l.b16 %v230
    %v909 = vunpack.c.h.b16 %v230
    %v910 = vunpack.c.l.b16 %v231
    %v911 = vunpack.c.h.b16 %v231
    %v912 = vunpack.c.l.b16 %v232
    %v913 = vunpack.c.h.b16 %v232
    %v914 = vunpack.c.l.b16 %v233
    %v915 = vunpack.c.h.b16 %v233
    %v916 = vunpack.c.l.b16 %v234
    %v917 = vunpack.c.h.b16 %v234
    %v918 = vunpack.c.l.b16 %v235
    %v919 = vunpack.c.h.b16 %v235
    %v920 = vunpack.c.l.b16 %v236
    %v921 = vunpack.c.h.b16 %v236
    %v922 = vunpack.c.l.b16 %v237
    %v923 = vunpack.c.h.b16 %v237
    %v924 = vunpack.c.l.b16 %v238
    %v925 = vunpack.c.h.b16 %v238
    %v926 = vunpack.c.l.b16 %v239
    %v927 = vunpack.c.h.b16 %v239
    %v928 = vunpack.c.l.b16 %v240
    %v929 = vunpack.c.h.b16 %v240
    %v930 = vunpack.c.l.b16 %v241
    %v931 = vunpack.c.h.b16 %v241
    %v932 = vunpack.c.l.b16 %v242
    %v933 = vunpack.c.h.b16 %v242
    %v934 = vunpack.c.l.b16 %v243
    %v935 = vunpack.c.h.b16 %v243
    %v936 = vunpack.c.l.b16 %v244
    %v937 = vunpack.c.h.b16 %v244
    %v938 = vunpack.c.l.b16 %v245
    %v939 = vunpack.c.h.b16 %v245
    %v940 = vunpack.c.l.b16 %v246
    %v941 = vunpack.c.h.b16 %v246
    %v942 = vunpack.c.l.b16 %v247
    %v943 = vunpack.c.h.b16 %v247
    %v944 = vunpack.c.l.b16 %v248
    %v945 = vunpack.c.h.b16 %v248
    %v946 = vunpack.c.l.b16 %v249
    %v947 = vunpack.c.h.b16 %v249
    %v948 = vunpack.c.l.b16 %v250
    %v949 = vunpack.c.h.b16 %v250
    %v950 = vunpack.c.l.b16 %v251
    %v951 = vunpack.c.h.b16 %v251
    %v952 = vunpack.c.l.b16 %v252
    %v953 = vunpack.c.h.b16 %v252
    %v954 = vunpack.c.l.b16 %v253
    %v955 = vunpack.c.h.b16 %v253
    %v956 = vunpack.c.l.b16 %v254
    %v957 = vunpack.c.h.b16 %v254
    %v958 = vunpack.c.l.b16 %v255
    %v959 = vunpack.c.h.b16 %v255
    %v960 = vunpack.c.l.b16 %v256
    %v961 = vunpack.c.h.b16 %v256
    %v962 = vunpack.c.l.b16 %v257
    %v963 = vunpack.c.h.b16 %v257
    %v964 = vunpack.c.l.b16 %v258
    %v965 = vunpack.c.h.b16 %v258
    %v966 = vunpack.c.l.b16 %v259
    %v967 = vunpack.c.h.b16 %v259
    %v968 = vunpack.c.l.b16 %v260
    %v969 = vunpack.c.h.b16 %v260
    %v970 = vunpack.c.l.b16 %v261
    %v971 = vunpack.c.h.b16 %v261
    %v972 = vunpack.c.l.b16 %v262
    %v973 = vunpack.c.h.b16 %v262
    %v974 = vunpack.c.l.b16 %v263
    %v975 = vunpack.c.h.b16 %v263
    %v976 = vunpack.c.l.b16 %v264
    %v977 = vunpack.c.h.b16 %v264
    %v978 = vunpack.c.l.b16 %v265
    %v979 = vunpack.c.h.b16 %v265
    %v980 = vunpack.c.l.b16 %v266
    %v981 = vunpack.c.h.b16 %v266
    %v982 = vunpack.c.l.b16 %v267
    %v983 = vunpack.c.h.b16 %v267
    %v984 = vunpack.c.l.b16 %v268
    %v985 = vunpack.c.h.b16 %v268
    %v986 = vunpack.c.l.b16 %v269
    %v987 = vunpack.c.h.b16 %v269
    %v988 = vunpack.c.l.b16 %v270
    %v989 = vunpack.c.h.b16 %v270
    %v990 = vunpack.c.l.b16 %v271
    %v991 = vunpack.c.h.b16 %v271
    %v992 = vpack.c.b16 %v872, %v864
    %v993 = vpack.c.b16 %v873, %v865
    %v994 = vpack.c.b16 %v874, %v866
    %v995 = vpack.c.b16 %v875, %v867
    %v996 = vpack.c.b16 %v876, %v868
    %v997 = vpack.c.b16 %v877, %v869
    %v998 = vpack.c.b16 %v878, %v870
    %v999 = vpack.c.b16 %v879, %v871
    %v1000 = vpack.c.b16 %v888, %v880
    %v1001 = vpack.c.b16 %v889, %v881
    %v1002 = vpack.c.b16 %v890, %v882
    %v1003 = vpack.c.b16 %v891, %v883
    %v1004 = vpack.c.b16 %v892, %v884
    %v1005 = vpack.c.b16 %v893, %v885
    %v1006 = vpack.c.b16 %v894, %v886
    %v1007 = vpack.c.b16 %v895, %v887
    %v1008 = vpack.c.b16 %v904, %v896
    %v1009 = vpack.c.b16 %v905, %v897
    %v1010 = vpack.c.b16 %v906, %v898
    %v1011 = vpack.c.b16 %v907, %v899
    %v1012 = vpack.c.b16 %v908, %v900
    %v1013 = vpack.c.b16 %v909, %v901
    %v1014 = vpack.c.b16 %v910, %v902
    %v1015 = vpack.c.b16 %v911, %v903
    %v1016 = vpack.c.b16 %v920, %v912
    %v1017 = vpack.c.b16 %v921, %v913
    %v1018 = vpack.c.b16 %v922, %v914
    %v1019 = vpack.c.b16 %v923, %v915
    %v1020 = vpack.c.b16 %v924, %v916
    %v1021 = vpack.c.b16 %v925, %v917
    %v1022 = vpack.c.b16 %v926, %v918
    %v1023 = vpack.c.b16 %v927, %v919
    %v1024 = vpack.c.b16 %v936, %v928
    %v1025 = vpack.c.b16 %v937, %v929
    %v1026 = vpack.c.b16 %v938, %v930
    %v1027 = vpack.c.b16 %v939, %v931
    %v1028 = vpack.c.b16 %v940, %v932
    %v1029 = vpack.c.b16 %v941, %v933
    %v1030 = vpack.c.b16 %v942, %v934
    %v1031 = vpack.c.b16 %v943, %v935
    %v1032 = vpack.c.b16 %v952, %v944
    %v1033 = vpack.c.b16 %v953, %v945
    %v1034 = vpack.c.b16 %v954, %v946
    %v1035 = vpack.c.b16 %v955, %v947
    %v1036 = vpack.c.b16 %v956, %v948
    %v1037 = vpack.c.b16 %v957, %v949
    %v1038 = vpack.c.b16 %v958, %v950
    %v1039 = vpack.c.b16 %v959, %v951
    %v1040 = vpack.c.b16 %v968, %v960
    %v1041 = vpack.c.b16 %v969, %v961
    %v1042 = vpack.c.b16 %v970, %v962
    %v1043 = vpack.c.b16 %v971, %v963
    %v1044 = vpack.c.b16 %v972, %v964
    %v1045 = vpack.c.b16 %v973, %v965
    %v1046 = vpack.c.b16 %v974, %v966
    %v1047 = vpack.c.b16 %v975, %v967
    %v1048 = vpack.c.b16 %v984, %v976
    %v1049 = vpack.c.b16 %v985, %v977
    %v1050 = vpack.c.b16 %v986, %v978
    %v1051 = vpack.c.b16 %v987, %v979
    %v1052 = vpack.c.b16 %v988, %v980
    %v1053 = vpack.c.b16 %v989, %v981
    %v1054 = vpack.c.b16 %v990, %v982
    %v1055 = vpack.c.b16 %v991, %v983
    %1120 = vmatpush.bf16.msra.mxu0 %v1048
    %1121 = vmatpush.bf16.msra.mxu0 %v1040
    %1122 = vmatpush.bf16.msra.mxu0 %v1032
    %1123 = vmatpush.bf16.msra.mxu0 %v1024
    %1124 = vmatpush.bf16.msra.mxu0 %v1016
    %1125 = vmatpush.bf16.msra.mxu0 %v1008
    %1126 = vmatpush.bf16.msra.mxu0 %v1000
    %1127 = vmatpush.bf16.msra.mxu0 %v992
    %1128 = vmatmul.bf16.gmra.mxu0 %v782
    %v1129 = vpop.f32.mrf.mxu0
    %v1130 = vadd.f32 %v784, %v1129
    %v1131 = vpop.f32.mrf.mxu0
    %1132 = vdwg.mxu0
    %1133 = vmatpush.bf16.msra.mxu0 %v1049
    %1134 = vmatpush.bf16.msra.mxu0 %v1041
    %1135 = vmatpush.bf16.msra.mxu0 %v1033
    %1136 = vmatpush.bf16.msra.mxu0 %v1025
    %1137 = vmatpush.bf16.msra.mxu0 %v1017
    %1138 = vmatpush.bf16.msra.mxu0 %v1009
    %1139 = vmatpush.bf16.msra.mxu0 %v1001
    %1140 = vmatpush.bf16.msra.mxu0 %v993
    %1141 = vmatmul.bf16.gmra.mxu0 %v782
    %v1142 = vpop.f32.mrf.mxu0
    %v1143 = vadd.f32 %v785, %v1142
    %v1144 = vpop.f32.mrf.mxu0
    %1145 = vdwg.mxu0
    %1146 = vmatpush.bf16.msra.mxu0 %v1050
    %1147 = vmatpush.bf16.msra.mxu0 %v1042
    %1148 = vmatpush.bf16.msra.mxu0 %v1034
    %1149 = vmatpush.bf16.msra.mxu0 %v1026
    %1150 = vmatpush.bf16.msra.mxu0 %v1018
    %1151 = vmatpush.bf16.msra.mxu0 %v1010
    %1152 = vmatpush.bf16.msra.mxu0 %v1002
    %1153 = vmatpush.bf16.msra.mxu0 %v994
    %1154 = vmatmul.bf16.gmra.mxu0 %v782
    %v1155 = vpop.f32.mrf.mxu0
    %v1156 = vadd.f32 %v786, %v1155
    %v1157 = vpop.f32.mrf.mxu0
    %1158 = vdwg.mxu0
    %1159 = vmatpush.bf16.msra.mxu0 %v1051
    %1160 = vmatpush.bf16.msra.mxu0 %v1043
    %1161 = vmatpush.bf16.msra.mxu0 %v1035
    %1162 = vmatpush.bf16.msra.mxu0 %v1027
    %1163 = vmatpush.bf16.msra.mxu0 %v1019
    %1164 = vmatpush.bf16.msra.mxu0 %v1011
    %1165 = vmatpush.bf16.msra.mxu0 %v1003
    %1166 = vmatpush.bf16.msra.mxu0 %v995
    %1167 = vmatmul.bf16.gmra.mxu0 %v782
    %v1168 = vpop.f32.mrf.mxu0
    %v1169 = vadd.f32 %v787, %v1168
    %v1170 = vpop.f32.mrf.mxu0
    %1171 = vdwg.mxu0
    %1172 = vmatpush.bf16.msra.mxu0 %v1052
    %1173 = vmatpush.bf16.msra.mxu0 %v1044
    %1174 = vmatpush.bf16.msra.mxu0 %v1036
    %1175 = vmatpush.bf16.msra.mxu0 %v1028
    %1176 = vmatpush.bf16.msra.mxu0 %v1020
    %1177 = vmatpush.bf16.msra.mxu0 %v1012
    %1178 = vmatpush.bf16.msra.mxu0 %v1004
    %1179 = vmatpush.bf16.msra.mxu0 %v996
    %1180 = vmatmul.bf16.gmra.mxu0 %v782
    %v1181 = vpop.f32.mrf.mxu0
    %v1182 = vadd.f32 %v788, %v1181
    %v1183 = vpop.f32.mrf.mxu0
    %1184 = vdwg.mxu0
    %1185 = vmatpush.bf16.msra.mxu0 %v1053
    %1186 = vmatpush.bf16.msra.mxu0 %v1045
    %1187 = vmatpush.bf16.msra.mxu0 %v1037
    %1188 = vmatpush.bf16.msra.mxu0 %v1029
    %1189 = vmatpush.bf16.msra.mxu0 %v1021
    %1190 = vmatpush.bf16.msra.mxu0 %v1013
    %1191 = vmatpush.bf16.msra.mxu0 %v1005
    %1192 = vmatpush.bf16.msra.mxu0 %v997
    %1193 = vmatmul.bf16.gmra.mxu0 %v782
    %v1194 = vpop.f32.mrf.mxu0
    %v1195 = vadd.f32 %v789, %v1194
    %v1196 = vpop.f32.mrf.mxu0
    %1197 = vdwg.mxu0
    %1198 = vmatpush.bf16.msra.mxu0 %v1054
    %1199 = vmatpush.bf16.msra.mxu0 %v1046
    %1200 = vmatpush.bf16.msra.mxu0 %v1038
    %1201 = vmatpush.bf16.msra.mxu0 %v1030
    %1202 = vmatpush.bf16.msra.mxu0 %v1022
    %1203 = vmatpush.bf16.msra.mxu0 %v1014
    %1204 = vmatpush.bf16.msra.mxu0 %v1006
    %1205 = vmatpush.bf16.msra.mxu0 %v998
    %1206 = vmatmul.bf16.gmra.mxu0 %v782
    %v1207 = vpop.f32.mrf.mxu0
    %v1208 = vadd.f32 %v790, %v1207
    %v1209 = vpop.f32.mrf.mxu0
    %1210 = vdwg.mxu0
    %1211 = vmatpush.bf16.msra.mxu0 %v1055
    %1212 = vmatpush.bf16.msra.mxu0 %v1047
    %1213 = vmatpush.bf16.msra.mxu0 %v1039
    %1214 = vmatpush.bf16.msra.mxu0 %v1031
    %1215 = vmatpush.bf16.msra.mxu0 %v1023
    %1216 = vmatpush.bf16.msra.mxu0 %v1015
    %1217 = vmatpush.bf16.msra.mxu0 %v1007
    %1218 = vmatpush.bf16.msra.mxu0 %v999
    %1219 = vmatmul.bf16.gmra.mxu0 %v782
    %v1220 = vpop.f32.mrf.mxu0
    %v1221 = vadd.f32 %v791, %v1220
    %v1222 = vpop.f32.mrf.mxu0
    %1223 = vdwg.mxu0
    %v1224 = vadd.f32 %v274, %v1130
    %v1225 = vadd.f32 %v275, %v1143
    %v1226 = vadd.f32 %v276, %v1156
    %v1227 = vadd.f32 %v277, %v1169
    %v1228 = vadd.f32 %v278, %v1182
    %v1229 = vadd.f32 %v279, %v1195
    %v1230 = vadd.f32 %v280, %v1208
    %v1231 = vadd.f32 %v281, %v1221
    %1232 = vst [vmem:[#allocation10] sm:$0xff] %v1224
    %1233 = vst [vmem:[#allocation10 + $0x8] sm:$0xff] %v1225
    %1234 = vst [vmem:[#allocation10 + $0x10] sm:$0xff] %v1226
    %1235 = vst [vmem:[#allocation10 + $0x18] sm:$0xff] %v1227
    %1236 = vst [vmem:[#allocation10 + $0x20] sm:$0xff] %v1228
    %1237 = vst [vmem:[#allocation10 + $0x28] sm:$0xff] %v1229
    %1238 = vst [vmem:[#allocation10 + $0x30] sm:$0xff] %v1230
    %1239 = vst [vmem:[#allocation10 + $0x38] sm:$0xff] %v1231
    %v1240 = vld [vmem:[#allocation10] sm:$0xff]
    %v1241 = vld [vmem:[#allocation10 + $0x8] sm:$0xff]
    %v1242 = vld [vmem:[#allocation10 + $0x10] sm:$0xff]
    %v1243 = vld [vmem:[#allocation10 + $0x18] sm:$0xff]
    %v1244 = vld [vmem:[#allocation10 + $0x20] sm:$0xff]
    %v1245 = vld [vmem:[#allocation10 + $0x28] sm:$0xff]
    %v1246 = vld [vmem:[#allocation10 + $0x30] sm:$0xff]
    %v1247 = vld [vmem:[#allocation10 + $0x38] sm:$0xff]
    %v1248 = vpack.c.bf16 %v1240, %v1240
    %v1249 = vpack.c.bf16 %v1241, %v1241
    %v1250 = vpack.c.bf16 %v1242, %v1242
    %v1251 = vpack.c.bf16 %v1243, %v1243
    %v1252 = vpack.c.bf16 %v1244, %v1244
    %v1253 = vpack.c.bf16 %v1245, %v1245
    %v1254 = vpack.c.bf16 %v1246, %v1246
    %v1255 = vpack.c.bf16 %v1247, %v1247
    %1256 = vmatpush.bf16.msra.mxu0 %v556
    %1257 = vmatpush.bf16.msra.mxu0 %v555
    %1258 = vmatpush.bf16.msra.mxu0 %v554
    %1259 = vmatpush.bf16.msra.mxu0 %v553
    %1260 = vmatpush.bf16.msra.mxu0 %v552
    %1261 = vmatpush.bf16.msra.mxu0 %v551
    %1262 = vmatpush.bf16.msra.mxu0 %v550
    %1263 = vmatpush.bf16.msra.mxu0 %v549
    %1264 = vmatmul.bf16.gmra.mxu0 %v1248
    %v1265 = vpop.f32.mrf.mxu0
    %v1266 = vadd.f32 %v291, %v1265
    %v1267 = vpop.f32.mrf.mxu0
    %1268 = vdwg.mxu0
    %1269 = vmatpush.bf16.msra.mxu0 %v564
    %1270 = vmatpush.bf16.msra.mxu0 %v563
    %1271 = vmatpush.bf16.msra.mxu0 %v562
    %1272 = vmatpush.bf16.msra.mxu0 %v561
    %1273 = vmatpush.bf16.msra.mxu0 %v560
    %1274 = vmatpush.bf16.msra.mxu0 %v559
    %1275 = vmatpush.bf16.msra.mxu0 %v558
    %1276 = vmatpush.bf16.msra.mxu0 %v557
    %1277 = vmatmul.bf16.gmra.mxu0 %v1249
    %v1278 = vpop.f32.mrf.mxu0
    %v1279 = vadd.f32 %v1266, %v1278
    %v1280 = vpop.f32.mrf.mxu0
    %1281 = vdwg.mxu0
    %1282 = vmatpush.bf16.msra.mxu0 %v572
    %1283 = vmatpush.bf16.msra.mxu0 %v571
    %1284 = vmatpush.bf16.msra.mxu0 %v570
    %1285 = vmatpush.bf16.msra.mxu0 %v569
    %1286 = vmatpush.bf16.msra.mxu0 %v568
    %1287 = vmatpush.bf16.msra.mxu0 %v567
    %1288 = vmatpush.bf16.msra.mxu0 %v566
    %1289 = vmatpush.bf16.msra.mxu0 %v565
    %1290 = vmatmul.bf16.gmra.mxu0 %v1250
    %v1291 = vpop.f32.mrf.mxu0
    %v1292 = vadd.f32 %v1279, %v1291
    %v1293 = vpop.f32.mrf.mxu0
    %1294 = vdwg.mxu0
    %1295 = vmatpush.bf16.msra.mxu0 %v580
    %1296 = vmatpush.bf16.msra.mxu0 %v579
    %1297 = vmatpush.bf16.msra.mxu0 %v578
    %1298 = vmatpush.bf16.msra.mxu0 %v577
    %1299 = vmatpush.bf16.msra.mxu0 %v576
    %1300 = vmatpush.bf16.msra.mxu0 %v575
    %1301 = vmatpush.bf16.msra.mxu0 %v574
    %1302 = vmatpush.bf16.msra.mxu0 %v573
    %1303 = vmatmul.bf16.gmra.mxu0 %v1251
    %v1304 = vpop.f32.mrf.mxu0
    %v1305 = vadd.f32 %v1292, %v1304
    %v1306 = vpop.f32.mrf.mxu0
    %1307 = vdwg.mxu0
    %1308 = vmatpush.bf16.msra.mxu0 %v588
    %1309 = vmatpush.bf16.msra.mxu0 %v587
    %1310 = vmatpush.bf16.msra.mxu0 %v586
    %1311 = vmatpush.bf16.msra.mxu0 %v585
    %1312 = vmatpush.bf16.msra.mxu0 %v584
    %1313 = vmatpush.bf16.msra.mxu0 %v583
    %1314 = vmatpush.bf16.msra.mxu0 %v582
    %1315 = vmatpush.bf16.msra.mxu0 %v581
    %1316 = vmatmul.bf16.gmra.mxu0 %v1252
    %v1317 = vpop.f32.mrf.mxu0
    %v1318 = vadd.f32 %v1305, %v1317
    %v1319 = vpop.f32.mrf.mxu0
    %1320 = vdwg.mxu0
    %1321 = vmatpush.bf16.msra.mxu0 %v596
    %1322 = vmatpush.bf16.msra.mxu0 %v595
    %1323 = vmatpush.bf16.msra.mxu0 %v594
    %1324 = vmatpush.bf16.msra.mxu0 %v593
    %1325 = vmatpush.bf16.msra.mxu0 %v592
    %1326 = vmatpush.bf16.msra.mxu0 %v591
    %1327 = vmatpush.bf16.msra.mxu0 %v590
    %1328 = vmatpush.bf16.msra.mxu0 %v589
    %1329 = vmatmul.bf16.gmra.mxu0 %v1253
    %v1330 = vpop.f32.mrf.mxu0
    %v1331 = vadd.f32 %v1318, %v1330
    %v1332 = vpop.f32.mrf.mxu0
    %1333 = vdwg.mxu0
    %1334 = vmatpush.bf16.msra.mxu0 %v604
    %1335 = vmatpush.bf16.msra.mxu0 %v603
    %1336 = vmatpush.bf16.msra.mxu0 %v602
    %1337 = vmatpush.bf16.msra.mxu0 %v601
    %1338 = vmatpush.bf16.msra.mxu0 %v600
    %1339 = vmatpush.bf16.msra.mxu0 %v599
    %1340 = vmatpush.bf16.msra.mxu0 %v598
    %1341 = vmatpush.bf16.msra.mxu0 %v597
    %1342 = vmatmul.bf16.gmra.mxu0 %v1254
    %v1343 = vpop.f32.mrf.mxu0
    %v1344 = vadd.f32 %v1331, %v1343
    %v1345 = vpop.f32.mrf.mxu0
    %1346 = vdwg.mxu0
    %1347 = vmatpush.bf16.msra.mxu0 %v612
    %1348 = vmatpush.bf16.msra.mxu0 %v611
    %1349 = vmatpush.bf16.msra.mxu0 %v610
    %1350 = vmatpush.bf16.msra.mxu0 %v609
    %1351 = vmatpush.bf16.msra.mxu0 %v608
    %1352 = vmatpush.bf16.msra.mxu0 %v607
    %1353 = vmatpush.bf16.msra.mxu0 %v606
    %1354 = vmatpush.bf16.msra.mxu0 %v605
    %1355 = vmatmul.bf16.gmra.mxu0 %v1255
    %v1356 = vpop.f32.mrf.mxu0
    %v1357 = vadd.f32 %v1344, %v1356
    %v1358 = vpop.f32.mrf.mxu0
    %1359 = vdwg.mxu0
    %v1360 = vtanh.pop %v1357
    %v1361 = vpack.c.bf16 %v1360, %v1360
    %1362 = vmatpush.bf16.msra.mxu0 %v1048
    %1363 = vmatpush.bf16.msra.mxu0 %v1040
    %1364 = vmatpush.bf16.msra.mxu0 %v1032
    %1365 = vmatpush.bf16.msra.mxu0 %v1024
    %1366 = vmatpush.bf16.msra.mxu0 %v1016
    %1367 = vmatpush.bf16.msra.mxu0 %v1008
    %1368 = vmatpush.bf16.msra.mxu0 %v1000
    %1369 = vmatpush.bf16.msra.mxu0 %v992
    %1370 = vmatmul.bf16.gmra.mxu0 %v1361
    %v1371 = vpop.f32.mrf.mxu0
    %v1372 = vadd.f32 %v784, %v1371
    %v1373 = vpop.f32.mrf.mxu0
    %1374 = vdwg.mxu0
    %1375 = vmatpush.bf16.msra.mxu0 %v1049
    %1376 = vmatpush.bf16.msra.mxu0 %v1041
    %1377 = vmatpush.bf16.msra.mxu0 %v1033
    %1378 = vmatpush.bf16.msra.mxu0 %v1025
    %1379 = vmatpush.bf16.msra.mxu0 %v1017
    %1380 = vmatpush.bf16.msra.mxu0 %v1009
    %1381 = vmatpush.bf16.msra.mxu0 %v1001
    %1382 = vmatpush.bf16.msra.mxu0 %v993
    %1383 = vmatmul.bf16.gmra.mxu0 %v1361
    %v1384 = vpop.f32.mrf.mxu0
    %v1385 = vadd.f32 %v785, %v1384
    %v1386 = vpop.f32.mrf.mxu0
    %1387 = vdwg.mxu0
    %1388 = vmatpush.bf16.msra.mxu0 %v1050
    %1389 = vmatpush.bf16.msra.mxu0 %v1042
    %1390 = vmatpush.bf16.msra.mxu0 %v1034
    %1391 = vmatpush.bf16.msra.mxu0 %v1026
    %1392 = vmatpush.bf16.msra.mxu0 %v1018
    %1393 = vmatpush.bf16.msra.mxu0 %v1010
    %1394 = vmatpush.bf16.msra.mxu0 %v1002
    %1395 = vmatpush.bf16.msra.mxu0 %v994
    %1396 = vmatmul.bf16.gmra.mxu0 %v1361
    %v1397 = vpop.f32.mrf.mxu0
    %v1398 = vadd.f32 %v786, %v1397
    %v1399 = vpop.f32.mrf.mxu0
    %1400 = vdwg.mxu0
    %1401 = vmatpush.bf16.msra.mxu0 %v1051
    %1402 = vmatpush.bf16.msra.mxu0 %v1043
    %1403 = vmatpush.bf16.msra.mxu0 %v1035
    %1404 = vmatpush.bf16.msra.mxu0 %v1027
    %1405 = vmatpush.bf16.msra.mxu0 %v1019
    %1406 = vmatpush.bf16.msra.mxu0 %v1011
    %1407 = vmatpush.bf16.msra.mxu0 %v1003
    %1408 = vmatpush.bf16.msra.mxu0 %v995
    %1409 = vmatmul.bf16.gmra.mxu0 %v1361
    %v1410 = vpop.f32.mrf.mxu0
    %v1411 = vadd.f32 %v787, %v1410
    %v1412 = vpop.f32.mrf.mxu0
    %1413 = vdwg.mxu0
    %1414 = vmatpush.bf16.msra.mxu0 %v1052
    %1415 = vmatpush.bf16.msra.mxu0 %v1044
    %1416 = vmatpush.bf16.msra.mxu0 %v1036
    %1417 = vmatpush.bf16.msra.mxu0 %v1028
    %1418 = vmatpush.bf16.msra.mxu0 %v1020
    %1419 = vmatpush.bf16.msra.mxu0 %v1012
    %1420 = vmatpush.bf16.msra.mxu0 %v1004
    %1421 = vmatpush.bf16.msra.mxu0 %v996
    %1422 = vmatmul.bf16.gmra.mxu0 %v1361
    %v1423 = vpop.f32.mrf.mxu0
    %v1424 = vadd.f32 %v788, %v1423
    %v1425 = vpop.f32.mrf.mxu0
    %1426 = vdwg.mxu0
    %1427 = vmatpush.bf16.msra.mxu0 %v1053
    %1428 = vmatpush.bf16.msra.mxu0 %v1045
    %1429 = vmatpush.bf16.msra.mxu0 %v1037
    %1430 = vmatpush.bf16.msra.mxu0 %v1029
    %1431 = vmatpush.bf16.msra.mxu0 %v1021
    %1432 = vmatpush.bf16.msra.mxu0 %v1013
    %1433 = vmatpush.bf16.msra.mxu0 %v1005
    %1434 = vmatpush.bf16.msra.mxu0 %v997
    %1435 = vmatmul.bf16.gmra.mxu0 %v1361
    %v1436 = vpop.f32.mrf.mxu0
    %v1437 = vadd.f32 %v789, %v1436
    %v1438 = vpop.f32.mrf.mxu0
    %1439 = vdwg.mxu0
    %1440 = vmatpush.bf16.msra.mxu0 %v1054
    %1441 = vmatpush.bf16.msra.mxu0 %v1046
    %1442 = vmatpush.bf16.msra.mxu0 %v1038
    %1443 = vmatpush.bf16.msra.mxu0 %v1030
    %1444 = vmatpush.bf16.msra.mxu0 %v1022
    %1445 = vmatpush.bf16.msra.mxu0 %v1014
    %1446 = vmatpush.bf16.msra.mxu0 %v1006
    %1447 = vmatpush.bf16.msra.mxu0 %v998
    %1448 = vmatmul.bf16.gmra.mxu0 %v1361
    %v1449 = vpop.f32.mrf.mxu0
    %v1450 = vadd.f32 %v790, %v1449
    %v1451 = vpop.f32.mrf.mxu0
    %1452 = vdwg.mxu0
    %1453 = vmatpush.bf16.msra.mxu0 %v1055
    %1454 = vmatpush.bf16.msra.mxu0 %v1047
    %1455 = vmatpush.bf16.msra.mxu0 %v1039
    %1456 = vmatpush.bf16.msra.mxu0 %v1031
    %1457 = vmatpush.bf16.msra.mxu0 %v1023
    %1458 = vmatpush.bf16.msra.mxu0 %v1015
    %1459 = vmatpush.bf16.msra.mxu0 %v1007
    %1460 = vmatpush.bf16.msra.mxu0 %v999
    %1461 = vmatmul.bf16.gmra.mxu0 %v1361
    %v1462 = vpop.f32.mrf.mxu0
    %v1463 = vadd.f32 %v791, %v1462
    %v1464 = vpop.f32.mrf.mxu0
    %1465 = vdwg.mxu0
    %v1466 = vadd.f32 %v1240, %v1372
    %v1467 = vadd.f32 %v1241, %v1385
    %v1468 = vadd.f32 %v1242, %v1398
    %v1469 = vadd.f32 %v1243, %v1411
    %v1470 = vadd.f32 %v1244, %v1424
    %v1471 = vadd.f32 %v1245, %v1437
    %v1472 = vadd.f32 %v1246, %v1450
    %v1473 = vadd.f32 %v1247, %v1463
    %1474 = vst [vmem:[#allocation10] sm:$0xff] %v1466
    %1475 = vst [vmem:[#allocation10 + $0x8] sm:$0xff] %v1467
    %1476 = vst [vmem:[#allocation10 + $0x10] sm:$0xff] %v1468
    %1477 = vst [vmem:[#allocation10 + $0x18] sm:$0xff] %v1469
    %1478 = vst [vmem:[#allocation10 + $0x20] sm:$0xff] %v1470
    %1479 = vst [vmem:[#allocation10 + $0x28] sm:$0xff] %v1471
    %1480 = vst [vmem:[#allocation10 + $0x30] sm:$0xff] %v1472
    %1481 = vst [vmem:[#allocation10 + $0x38] sm:$0xff] %v1473
    %v1482 = vld [vmem:[#allocation10] sm:$0xff]
    %v1483 = vld [vmem:[#allocation10 + $0x8] sm:$0xff]
    %v1484 = vld [vmem:[#allocation10 + $0x10] sm:$0xff]
    %v1485 = vld [vmem:[#allocation10 + $0x18] sm:$0xff]
    %v1486 = vld [vmem:[#allocation10 + $0x20] sm:$0xff]
    %v1487 = vld [vmem:[#allocation10 + $0x28] sm:$0xff]
    %v1488 = vld [vmem:[#allocation10 + $0x30] sm:$0xff]
    %v1489 = vld [vmem:[#allocation10 + $0x38] sm:$0xff]
    %v1490 = vpack.c.bf16 %v1482, %v1482
    %v1491 = vpack.c.bf16 %v1483, %v1483
    %v1492 = vpack.c.bf16 %v1484, %v1484
    %v1493 = vpack.c.bf16 %v1485, %v1485
    %v1494 = vpack.c.bf16 %v1486, %v1486
    %v1495 = vpack.c.bf16 %v1487, %v1487
    %v1496 = vpack.c.bf16 %v1488, %v1488
    %v1497 = vpack.c.bf16 %v1489, %v1489
    %1498 = vmatpush.bf16.msra.mxu0 %v556
    %1499 = vmatpush.bf16.msra.mxu0 %v555
    %1500 = vmatpush.bf16.msra.mxu0 %v554
    %1501 = vmatpush.bf16.msra.mxu0 %v553
    %1502 = vmatpush.bf16.msra.mxu0 %v552
    %1503 = vmatpush.bf16.msra.mxu0 %v551
    %1504 = vmatpush.bf16.msra.mxu0 %v550
    %1505 = vmatpush.bf16.msra.mxu0 %v549
    %1506 = vmatmul.bf16.gmra.mxu0 %v1490
    %v1507 = vpop.f32.mrf.mxu0
    %v1508 = vadd.f32 %v291, %v1507
    %v1509 = vpop.f32.mrf.mxu0
    %1510 = vdwg.mxu0
    %1511 = vmatpush.bf16.msra.mxu0 %v564
    %1512 = vmatpush.bf16.msra.mxu0 %v563
    %1513 = vmatpush.bf16.msra.mxu0 %v562
    %1514 = vmatpush.bf16.msra.mxu0 %v561
    %1515 = vmatpush.bf16.msra.mxu0 %v560
    %1516 = vmatpush.bf16.msra.mxu0 %v559
    %1517 = vmatpush.bf16.msra.mxu0 %v558
    %1518 = vmatpush.bf16.msra.mxu0 %v557
    %1519 = vmatmul.bf16.gmra.mxu0 %v1491
    %v1520 = vpop.f32.mrf.mxu0
    %v1521 = vadd.f32 %v1508, %v1520
    %v1522 = vpop.f32.mrf.mxu0
    %1523 = vdwg.mxu0
    %1524 = vmatpush.bf16.msra.mxu0 %v572
    %1525 = vmatpush.bf16.msra.mxu0 %v571
    %1526 = vmatpush.bf16.msra.mxu0 %v570
    %1527 = vmatpush.bf16.msra.mxu0 %v569
    %1528 = vmatpush.bf16.msra.mxu0 %v568
    %1529 = vmatpush.bf16.msra.mxu0 %v567
    %1530 = vmatpush.bf16.msra.mxu0 %v566
    %1531 = vmatpush.bf16.msra.mxu0 %v565
    %1532 = vmatmul.bf16.gmra.mxu0 %v1492
    %v1533 = vpop.f32.mrf.mxu0
    %v1534 = vadd.f32 %v1521, %v1533
    %v1535 = vpop.f32.mrf.mxu0
    %1536 = vdwg.mxu0
    %1537 = vmatpush.bf16.msra.mxu0 %v580
    %1538 = vmatpush.bf16.msra.mxu0 %v579
    %1539 = vmatpush.bf16.msra.mxu0 %v578
    %1540 = vmatpush.bf16.msra.mxu0 %v577
    %1541 = vmatpush.bf16.msra.mxu0 %v576
    %1542 = vmatpush.bf16.msra.mxu0 %v575
    %1543 = vmatpush.bf16.msra.mxu0 %v574
    %1544 = vmatpush.bf16.msra.mxu0 %v573
    %1545 = vmatmul.bf16.gmra.mxu0 %v1493
    %v1546 = vpop.f32.mrf.mxu0
    %v1547 = vadd.f32 %v1534, %v1546
    %v1548 = vpop.f32.mrf.mxu0
    %1549 = vdwg.mxu0
    %1550 = vmatpush.bf16.msra.mxu0 %v588
    %1551 = vmatpush.bf16.msra.mxu0 %v587
    %1552 = vmatpush.bf16.msra.mxu0 %v586
    %1553 = vmatpush.bf16.msra.mxu0 %v585
    %1554 = vmatpush.bf16.msra.mxu0 %v584
    %1555 = vmatpush.bf16.msra.mxu0 %v583
    %1556 = vmatpush.bf16.msra.mxu0 %v582
    %1557 = vmatpush.bf16.msra.mxu0 %v581
    %1558 = vmatmul.bf16.gmra.mxu0 %v1494
    %v1559 = vpop.f32.mrf.mxu0
    %v1560 = vadd.f32 %v1547, %v1559
    %v1561 = vpop.f32.mrf.mxu0
    %1562 = vdwg.mxu0
    %1563 = vmatpush.bf16.msra.mxu0 %v596
    %1564 = vmatpush.bf16.msra.mxu0 %v595
    %1565 = vmatpush.bf16.msra.mxu0 %v594
    %1566 = vmatpush.bf16.msra.mxu0 %v593
    %1567 = vmatpush.bf16.msra.mxu0 %v592
    %1568 = vmatpush.bf16.msra.mxu0 %v591
    %1569 = vmatpush.bf16.msra.mxu0 %v590
    %1570 = vmatpush.bf16.msra.mxu0 %v589
    %1571 = vmatmul.bf16.gmra.mxu0 %v1495
    %v1572 = vpop.f32.mrf.mxu0
    %v1573 = vadd.f32 %v1560, %v1572
    %v1574 = vpop.f32.mrf.mxu0
    %1575 = vdwg.mxu0
    %1576 = vmatpush.bf16.msra.mxu0 %v604
    %1577 = vmatpush.bf16.msra.mxu0 %v603
    %1578 = vmatpush.bf16.msra.mxu0 %v602
    %1579 = vmatpush.bf16.msra.mxu0 %v601
    %1580 = vmatpush.bf16.msra.mxu0 %v600
    %1581 = vmatpush.bf16.msra.mxu0 %v599
    %1582 = vmatpush.bf16.msra.mxu0 %v598
    %1583 = vmatpush.bf16.msra.mxu0 %v597
    %1584 = vmatmul.bf16.gmra.mxu0 %v1496
    %v1585 = vpop.f32.mrf.mxu0
    %v1586 = vadd.f32 %v1573, %v1585
    %v1587 = vpop.f32.mrf.mxu0
    %1588 = vdwg.mxu0
    %1589 = vmatpush.bf16.msra.mxu0 %v612
    %1590 = vmatpush.bf16.msra.mxu0 %v611
    %1591 = vmatpush.bf16.msra.mxu0 %v610
    %1592 = vmatpush.bf16.msra.mxu0 %v609
    %1593 = vmatpush.bf16.msra.mxu0 %v608
    %1594 = vmatpush.bf16.msra.mxu0 %v607
    %1595 = vmatpush.bf16.msra.mxu0 %v606
    %1596 = vmatpush.bf16.msra.mxu0 %v605
    %1597 = vmatmul.bf16.gmra.mxu0 %v1497
    %v1598 = vpop.f32.mrf.mxu0
    %v1599 = vadd.f32 %v1586, %v1598
    %v1600 = vpop.f32.mrf.mxu0
    %1601 = vdwg.mxu0
    %v1602 = vtanh.pop %v1599
    %v1603 = vpack.c.bf16 %v1602, %v1602
    %1604 = vmatpush.bf16.msra.mxu0 %v1048
    %1605 = vmatpush.bf16.msra.mxu0 %v1040
    %1606 = vmatpush.bf16.msra.mxu0 %v1032
    %1607 = vmatpush.bf16.msra.mxu0 %v1024
    %1608 = vmatpush.bf16.msra.mxu0 %v1016
    %1609 = vmatpush.bf16.msra.mxu0 %v1008
    %1610 = vmatpush.bf16.msra.mxu0 %v1000
    %1611 = vmatpush.bf16.msra.mxu0 %v992
    %1612 = vmatmul.bf16.gmra.mxu0 %v1603
    %v1613 = vpop.f32.mrf.mxu0
    %v1614 = vadd.f32 %v784, %v1613
    %v1615 = vpop.f32.mrf.mxu0
    %1616 = vdwg.mxu0
    %1617 = vmatpush.bf16.msra.mxu0 %v1049
    %1618 = vmatpush.bf16.msra.mxu0 %v1041
    %1619 = vmatpush.bf16.msra.mxu0 %v1033
    %1620 = vmatpush.bf16.msra.mxu0 %v1025
    %1621 = vmatpush.bf16.msra.mxu0 %v1017
    %1622 = vmatpush.bf16.msra.mxu0 %v1009
    %1623 = vmatpush.bf16.msra.mxu0 %v1001
    %1624 = vmatpush.bf16.msra.mxu0 %v993
    %1625 = vmatmul.bf16.gmra.mxu0 %v1603
    %v1626 = vpop.f32.mrf.mxu0
    %v1627 = vadd.f32 %v785, %v1626
    %v1628 = vpop.f32.mrf.mxu0
    %1629 = vdwg.mxu0
    %1630 = vmatpush.bf16.msra.mxu0 %v1050
    %1631 = vmatpush.bf16.msra.mxu0 %v1042
    %1632 = vmatpush.bf16.msra.mxu0 %v1034
    %1633 = vmatpush.bf16.msra.mxu0 %v1026
    %1634 = vmatpush.bf16.msra.mxu0 %v1018
    %1635 = vmatpush.bf16.msra.mxu0 %v1010
    %1636 = vmatpush.bf16.msra.mxu0 %v1002
    %1637 = vmatpush.bf16.msra.mxu0 %v994
    %1638 = vmatmul.bf16.gmra.mxu0 %v1603
    %v1639 = vpop.f32.mrf.mxu0
    %v1640 = vadd.f32 %v786, %v1639
    %v1641 = vpop.f32.mrf.mxu0
    %1642 = vdwg.mxu0
    %1643 = vmatpush.bf16.msra.mxu0 %v1051
    %1644 = vmatpush.bf16.msra.mxu0 %v1043
    %1645 = vmatpush.bf16.msra.mxu0 %v1035
    %1646 = vmatpush.bf16.msra.mxu0 %v1027
    %1647 = vmatpush.bf16.msra.mxu0 %v1019
    %1648 = vmatpush.bf16.msra.mxu0 %v1011
    %1649 = vmatpush.bf16.msra.mxu0 %v1003
    %1650 = vmatpush.bf16.msra.mxu0 %v995
    %1651 = vmatmul.bf16.gmra.mxu0 %v1603
    %v1652 = vpop.f32.mrf.mxu0
    %v1653 = vadd.f32 %v787, %v1652
    %v1654 = vpop.f32.mrf.mxu0
    %1655 = vdwg.mxu0
    %1656 = vmatpush.bf16.msra.mxu0 %v1052
    %1657 = vmatpush.bf16.msra.mxu0 %v1044
    %1658 = vmatpush.bf16.msra.mxu0 %v1036
    %1659 = vmatpush.bf16.msra.mxu0 %v1028
    %1660 = vmatpush.bf16.msra.mxu0 %v1020
    %1661 = vmatpush.bf16.msra.mxu0 %v1012
    %1662 = vmatpush.bf16.msra.mxu0 %v1004
    %1663 = vmatpush.bf16.msra.mxu0 %v996
    %1664 = vmatmul.bf16.gmra.mxu0 %v1603
    %v1665 = vpop.f32.mrf.mxu0
    %v1666 = vadd.f32 %v788, %v1665
    %v1667 = vpop.f32.mrf.mxu0
    %1668 = vdwg.mxu0
    %1669 = vmatpush.bf16.msra.mxu0 %v1053
    %1670 = vmatpush.bf16.msra.mxu0 %v1045
    %1671 = vmatpush.bf16.msra.mxu0 %v1037
    %1672 = vmatpush.bf16.msra.mxu0 %v1029
    %1673 = vmatpush.bf16.msra.mxu0 %v1021
    %1674 = vmatpush.bf16.msra.mxu0 %v1013
    %1675 = vmatpush.bf16.msra.mxu0 %v1005
    %1676 = vmatpush.bf16.msra.mxu0 %v997
    %1677 = vmatmul.bf16.gmra.mxu0 %v1603
    %v1678 = vpop.f32.mrf.mxu0
    %v1679 = vadd.f32 %v789, %v1678
    %v1680 = vpop.f32.mrf.mxu0
    %1681 = vdwg.mxu0
    %1682 = vmatpush.bf16.msra.mxu0 %v1054
    %1683 = vmatpush.bf16.msra.mxu0 %v1046
    %1684 = vmatpush.bf16.msra.mxu0 %v1038
    %1685 = vmatpush.bf16.msra.mxu0 %v1030
    %1686 = vmatpush.bf16.msra.mxu0 %v1022
    %1687 = vmatpush.bf16.msra.mxu0 %v1014
    %1688 = vmatpush.bf16.msra.mxu0 %v1006
    %1689 = vmatpush.bf16.msra.mxu0 %v998
    %1690 = vmatmul.bf16.gmra.mxu0 %v1603
    %v1691 = vpop.f32.mrf.mxu0
    %v1692 = vadd.f32 %v790, %v1691
    %v1693 = vpop.f32.mrf.mxu0
    %1694 = vdwg.mxu0
    %1695 = vmatpush.bf16.msra.mxu0 %v1055
    %1696 = vmatpush.bf16.msra.mxu0 %v1047
    %1697 = vmatpush.bf16.msra.mxu0 %v1039
    %1698 = vmatpush.bf16.msra.mxu0 %v1031
    %1699 = vmatpush.bf16.msra.mxu0 %v1023
    %1700 = vmatpush.bf16.msra.mxu0 %v1015
    %1701 = vmatpush.bf16.msra.mxu0 %v1007
    %1702 = vmatpush.bf16.msra.mxu0 %v999
    %1703 = vmatmul.bf16.gmra.mxu0 %v1603
    %v1704 = vpop.f32.mrf.mxu0
    %v1705 = vadd.f32 %v791, %v1704
    %v1706 = vpop.f32.mrf.mxu0
    %1707 = vdwg.mxu0
    %v1708 = vadd.f32 %v1482, %v1614
    %v1709 = vadd.f32 %v1483, %v1627
    %v1710 = vadd.f32 %v1484, %v1640
    %v1711 = vadd.f32 %v1485, %v1653
    %v1712 = vadd.f32 %v1486, %v1666
    %v1713 = vadd.f32 %v1487, %v1679
    %v1714 = vadd.f32 %v1488, %v1692
    %v1715 = vadd.f32 %v1489, %v1705
    %1716 = vst [vmem:[#allocation10] sm:$0xff] %v1708
    %1717 = vst [vmem:[#allocation10 + $0x8] sm:$0xff] %v1709
    %1718 = vst [vmem:[#allocation10 + $0x10] sm:$0xff] %v1710
    %1719 = vst [vmem:[#allocation10 + $0x18] sm:$0xff] %v1711
    %1720 = vst [vmem:[#allocation10 + $0x20] sm:$0xff] %v1712
    %1721 = vst [vmem:[#allocation10 + $0x28] sm:$0xff] %v1713
    %1722 = vst [vmem:[#allocation10 + $0x30] sm:$0xff] %v1714
    %1723 = vst [vmem:[#allocation10 + $0x38] sm:$0xff] %v1715
    %v1724 = vld [vmem:[#allocation10] sm:$0xff]
    %v1725 = vld [vmem:[#allocation10 + $0x8] sm:$0xff]
    %v1726 = vld [vmem:[#allocation10 + $0x10] sm:$0xff]
    %v1727 = vld [vmem:[#allocation10 + $0x18] sm:$0xff]
    %v1728 = vld [vmem:[#allocation10 + $0x20] sm:$0xff]
    %v1729 = vld [vmem:[#allocation10 + $0x28] sm:$0xff]
    %v1730 = vld [vmem:[#allocation10 + $0x30] sm:$0xff]
    %v1731 = vld [vmem:[#allocation10 + $0x38] sm:$0xff]
    %v1732 = vpack.c.bf16 %v1724, %v1724
    %v1733 = vpack.c.bf16 %v1725, %v1725
    %v1734 = vpack.c.bf16 %v1726, %v1726
    %v1735 = vpack.c.bf16 %v1727, %v1727
    %v1736 = vpack.c.bf16 %v1728, %v1728
    %v1737 = vpack.c.bf16 %v1729, %v1729
    %v1738 = vpack.c.bf16 %v1730, %v1730
    %v1739 = vpack.c.bf16 %v1731, %v1731
    %1740 = vmatpush.bf16.msra.mxu0 %v556
    %1741 = vmatpush.bf16.msra.mxu0 %v555
    %1742 = vmatpush.bf16.msra.mxu0 %v554
    %1743 = vmatpush.bf16.msra.mxu0 %v553
    %1744 = vmatpush.bf16.msra.mxu0 %v552
    %1745 = vmatpush.bf16.msra.mxu0 %v551
    %1746 = vmatpush.bf16.msra.mxu0 %v550
    %1747 = vmatpush.bf16.msra.mxu0 %v549
    %1748 = vmatmul.bf16.gmra.mxu0 %v1732
    %v1749 = vpop.f32.mrf.mxu0
    %v1750 = vadd.f32 %v291, %v1749
    %v1751 = vpop.f32.mrf.mxu0
    %1752 = vdwg.mxu0
    %1753 = vmatpush.bf16.msra.mxu0 %v564
    %1754 = vmatpush.bf16.msra.mxu0 %v563
    %1755 = vmatpush.bf16.msra.mxu0 %v562
    %1756 = vmatpush.bf16.msra.mxu0 %v561
    %1757 = vmatpush.bf16.msra.mxu0 %v560
    %1758 = vmatpush.bf16.msra.mxu0 %v559
    %1759 = vmatpush.bf16.msra.mxu0 %v558
    %1760 = vmatpush.bf16.msra.mxu0 %v557
    %1761 = vmatmul.bf16.gmra.mxu0 %v1733
    %v1762 = vpop.f32.mrf.mxu0
    %v1763 = vadd.f32 %v1750, %v1762
    %v1764 = vpop.f32.mrf.mxu0
    %1765 = vdwg.mxu0
    %1766 = vmatpush.bf16.msra.mxu0 %v572
    %1767 = vmatpush.bf16.msra.mxu0 %v571
    %1768 = vmatpush.bf16.msra.mxu0 %v570
    %1769 = vmatpush.bf16.msra.mxu0 %v569
    %1770 = vmatpush.bf16.msra.mxu0 %v568
    %1771 = vmatpush.bf16.msra.mxu0 %v567
    %1772 = vmatpush.bf16.msra.mxu0 %v566
    %1773 = vmatpush.bf16.msra.mxu0 %v565
    %1774 = vmatmul.bf16.gmra.mxu0 %v1734
    %v1775 = vpop.f32.mrf.mxu0
    %v1776 = vadd.f32 %v1763, %v1775
    %v1777 = vpop.f32.mrf.mxu0
    %1778 = vdwg.mxu0
    %1779 = vmatpush.bf16.msra.mxu0 %v580
    %1780 = vmatpush.bf16.msra.mxu0 %v579
    %1781 = vmatpush.bf16.msra.mxu0 %v578
    %1782 = vmatpush.bf16.msra.mxu0 %v577
    %1783 = vmatpush.bf16.msra.mxu0 %v576
    %1784 = vmatpush.bf16.msra.mxu0 %v575
    %1785 = vmatpush.bf16.msra.mxu0 %v574
    %1786 = vmatpush.bf16.msra.mxu0 %v573
    %1787 = vmatmul.bf16.gmra.mxu0 %v1735
    %v1788 = vpop.f32.mrf.mxu0
    %v1789 = vadd.f32 %v1776, %v1788
    %v1790 = vpop.f32.mrf.mxu0
    %1791 = vdwg.mxu0
    %1792 = vmatpush.bf16.msra.mxu0 %v588
    %1793 = vmatpush.bf16.msra.mxu0 %v587
    %1794 = vmatpush.bf16.msra.mxu0 %v586
    %1795 = vmatpush.bf16.msra.mxu0 %v585
    %1796 = vmatpush.bf16.msra.mxu0 %v584
    %1797 = vmatpush.bf16.msra.mxu0 %v583
    %1798 = vmatpush.bf16.msra.mxu0 %v582
    %1799 = vmatpush.bf16.msra.mxu0 %v581
    %1800 = vmatmul.bf16.gmra.mxu0 %v1736
    %v1801 = vpop.f32.mrf.mxu0
    %v1802 = vadd.f32 %v1789, %v1801
    %v1803 = vpop.f32.mrf.mxu0
    %1804 = vdwg.mxu0
    %1805 = vmatpush.bf16.msra.mxu0 %v596
    %1806 = vmatpush.bf16.msra.mxu0 %v595
    %1807 = vmatpush.bf16.msra.mxu0 %v594
    %1808 = vmatpush.bf16.msra.mxu0 %v593
    %1809 = vmatpush.bf16.msra.mxu0 %v592
    %1810 = vmatpush.bf16.msra.mxu0 %v591
    %1811 = vmatpush.bf16.msra.mxu0 %v590
    %1812 = vmatpush.bf16.msra.mxu0 %v589
    %1813 = vmatmul.bf16.gmra.mxu0 %v1737
    %v1814 = vpop.f32.mrf.mxu0
    %v1815 = vadd.f32 %v1802, %v1814
    %v1816 = vpop.f32.mrf.mxu0
    %1817 = vdwg.mxu0
    %1818 = vmatpush.bf16.msra.mxu0 %v604
    %1819 = vmatpush.bf16.msra.mxu0 %v603
    %1820 = vmatpush.bf16.msra.mxu0 %v602
    %1821 = vmatpush.bf16.msra.mxu0 %v601
    %1822 = vmatpush.bf16.msra.mxu0 %v600
    %1823 = vmatpush.bf16.msra.mxu0 %v599
    %1824 = vmatpush.bf16.msra.mxu0 %v598
    %1825 = vmatpush.bf16.msra.mxu0 %v597
    %1826 = vmatmul.bf16.gmra.mxu0 %v1738
    %v1827 = vpop.f32.mrf.mxu0
    %v1828 = vadd.f32 %v1815, %v1827
    %v1829 = vpop.f32.mrf.mxu0
    %1830 = vdwg.mxu0
    %1831 = vmatpush.bf16.msra.mxu0 %v612
    %1832 = vmatpush.bf16.msra.mxu0 %v611
    %1833 = vmatpush.bf16.msra.mxu0 %v610
    %1834 = vmatpush.bf16.msra.mxu0 %v609
    %1835 = vmatpush.bf16.msra.mxu0 %v608
    %1836 = vmatpush.bf16.msra.mxu0 %v607
    %1837 = vmatpush.bf16.msra.mxu0 %v606
    %1838 = vmatpush.bf16.msra.mxu0 %v605
    %1839 = vmatmul.bf16.gmra.mxu0 %v1739
    %v1840 = vpop.f32.mrf.mxu0
    %v1841 = vadd.f32 %v1828, %v1840
    %v1842 = vpop.f32.mrf.mxu0
    %1843 = vdwg.mxu0
    %v1844 = vtanh.pop %v1841
    %v1845 = vpack.c.bf16 %v1844, %v1844
    %1846 = vmatpush.bf16.msra.mxu0 %v1048
    %1847 = vmatpush.bf16.msra.mxu0 %v1040
    %1848 = vmatpush.bf16.msra.mxu0 %v1032
    %1849 = vmatpush.bf16.msra.mxu0 %v1024
    %1850 = vmatpush.bf16.msra.mxu0 %v1016
    %1851 = vmatpush.bf16.msra.mxu0 %v1008
    %1852 = vmatpush.bf16.msra.mxu0 %v1000
    %1853 = vmatpush.bf16.msra.mxu0 %v992
    %1854 = vmatmul.bf16.gmra.mxu0 %v1845
    %v1855 = vpop.f32.mrf.mxu0
    %v1856 = vadd.f32 %v784, %v1855
    %v1857 = vpop.f32.mrf.mxu0
    %1858 = vdwg.mxu0
    %1859 = vmatpush.bf16.msra.mxu0 %v1049
    %1860 = vmatpush.bf16.msra.mxu0 %v1041
    %1861 = vmatpush.bf16.msra.mxu0 %v1033
    %1862 = vmatpush.bf16.msra.mxu0 %v1025
    %1863 = vmatpush.bf16.msra.mxu0 %v1017
    %1864 = vmatpush.bf16.msra.mxu0 %v1009
    %1865 = vmatpush.bf16.msra.mxu0 %v1001
    %1866 = vmatpush.bf16.msra.mxu0 %v993
    %1867 = vmatmul.bf16.gmra.mxu0 %v1845
    %v1868 = vpop.f32.mrf.mxu0
    %v1869 = vadd.f32 %v785, %v1868
    %v1870 = vpop.f32.mrf.mxu0
    %1871 = vdwg.mxu0
    %1872 = vmatpush.bf16.msra.mxu0 %v1050
    %1873 = vmatpush.bf16.msra.mxu0 %v1042
    %1874 = vmatpush.bf16.msra.mxu0 %v1034
    %1875 = vmatpush.bf16.msra.mxu0 %v1026
    %1876 = vmatpush.bf16.msra.mxu0 %v1018
    %1877 = vmatpush.bf16.msra.mxu0 %v1010
    %1878 = vmatpush.bf16.msra.mxu0 %v1002
    %1879 = vmatpush.bf16.msra.mxu0 %v994
    %1880 = vmatmul.bf16.gmra.mxu0 %v1845
    %v1881 = vpop.f32.mrf.mxu0
    %v1882 = vadd.f32 %v786, %v1881
    %v1883 = vpop.f32.mrf.mxu0
    %1884 = vdwg.mxu0
    %1885 = vmatpush.bf16.msra.mxu0 %v1051
    %1886 = vmatpush.bf16.msra.mxu0 %v1043
    %1887 = vmatpush.bf16.msra.mxu0 %v1035
    %1888 = vmatpush.bf16.msra.mxu0 %v1027
    %1889 = vmatpush.bf16.msra.mxu0 %v1019
    %1890 = vmatpush.bf16.msra.mxu0 %v1011
    %1891 = vmatpush.bf16.msra.mxu0 %v1003
    %1892 = vmatpush.bf16.msra.mxu0 %v995
    %1893 = vmatmul.bf16.gmra.mxu0 %v1845
    %v1894 = vpop.f32.mrf.mxu0
    %v1895 = vadd.f32 %v787, %v1894
    %v1896 = vpop.f32.mrf.mxu0
    %1897 = vdwg.mxu0
    %1898 = vmatpush.bf16.msra.mxu0 %v1052
    %1899 = vmatpush.bf16.msra.mxu0 %v1044
    %1900 = vmatpush.bf16.msra.mxu0 %v1036
    %1901 = vmatpush.bf16.msra.mxu0 %v1028
    %1902 = vmatpush.bf16.msra.mxu0 %v1020
    %1903 = vmatpush.bf16.msra.mxu0 %v1012
    %1904 = vmatpush.bf16.msra.mxu0 %v1004
    %1905 = vmatpush.bf16.msra.mxu0 %v996
    %1906 = vmatmul.bf16.gmra.mxu0 %v1845
    %v1907 = vpop.f32.mrf.mxu0
    %v1908 = vadd.f32 %v788, %v1907
    %v1909 = vpop.f32.mrf.mxu0
    %1910 = vdwg.mxu0
    %1911 = vmatpush.bf16.msra.mxu0 %v1053
    %1912 = vmatpush.bf16.msra.mxu0 %v1045
    %1913 = vmatpush.bf16.msra.mxu0 %v1037
    %1914 = vmatpush.bf16.msra.mxu0 %v1029
    %1915 = vmatpush.bf16.msra.mxu0 %v1021
    %1916 = vmatpush.bf16.msra.mxu0 %v1013
    %1917 = vmatpush.bf16.msra.mxu0 %v1005
    %1918 = vmatpush.bf16.msra.mxu0 %v997
    %1919 = vmatmul.bf16.gmra.mxu0 %v1845
    %v1920 = vpop.f32.mrf.mxu0
    %v1921 = vadd.f32 %v789, %v1920
    %v1922 = vpop.f32.mrf.mxu0
    %1923 = vdwg.mxu0
    %1924 = vmatpush.bf16.msra.mxu0 %v1054
    %1925 = vmatpush.bf16.msra.mxu0 %v1046
    %1926 = vmatpush.bf16.msra.mxu0 %v1038
    %1927 = vmatpush.bf16.msra.mxu0 %v1030
    %1928 = vmatpush.bf16.msra.mxu0 %v1022
    %1929 = vmatpush.bf16.msra.mxu0 %v1014
    %1930 = vmatpush.bf16.msra.mxu0 %v1006
    %1931 = vmatpush.bf16.msra.mxu0 %v998
    %1932 = vmatmul.bf16.gmra.mxu0 %v1845
    %v1933 = vpop.f32.mrf.mxu0
    %v1934 = vadd.f32 %v790, %v1933
    %v1935 = vpop.f32.mrf.mxu0
    %1936 = vdwg.mxu0
    %1937 = vmatpush.bf16.msra.mxu0 %v1055
    %1938 = vmatpush.bf16.msra.mxu0 %v1047
    %1939 = vmatpush.bf16.msra.mxu0 %v1039
    %1940 = vmatpush.bf16.msra.mxu0 %v1031
    %1941 = vmatpush.bf16.msra.mxu0 %v1023
    %1942 = vmatpush.bf16.msra.mxu0 %v1015
    %1943 = vmatpush.bf16.msra.mxu0 %v1007
    %1944 = vmatpush.bf16.msra.mxu0 %v999
    %1945 = vmatmul.bf16.gmra.mxu0 %v1845
    %v1946 = vpop.f32.mrf.mxu0
    %v1947 = vadd.f32 %v791, %v1946
    %v1948 = vpop.f32.mrf.mxu0
    %1949 = vdwg.mxu0
    %v1950 = vadd.f32 %v1724, %v1856
    %v1951 = vadd.f32 %v1725, %v1869
    %v1952 = vadd.f32 %v1726, %v1882
    %v1953 = vadd.f32 %v1727, %v1895
    %v1954 = vadd.f32 %v1728, %v1908
    %v1955 = vadd.f32 %v1729, %v1921
    %v1956 = vadd.f32 %v1730, %v1934
    %v1957 = vadd.f32 %v1731, %v1947
    %1958 = vst [vmem:[#allocation10] sm:$0xff] %v1950
    %1959 = vst [vmem:[#allocation10 + $0x8] sm:$0xff] %v1951
    %1960 = vst [vmem:[#allocation10 + $0x10] sm:$0xff] %v1952
    %1961 = vst [vmem:[#allocation10 + $0x18] sm:$0xff] %v1953
    %1962 = vst [vmem:[#allocation10 + $0x20] sm:$0xff] %v1954
    %1963 = vst [vmem:[#allocation10 + $0x28] sm:$0xff] %v1955
    %1964 = vst [vmem:[#allocation10 + $0x30] sm:$0xff] %v1956
    %1965 = vst [vmem:[#allocation10 + $0x38] sm:$0xff] %v1957
    %v1966 = vld [vmem:[#allocation10] sm:$0xff]
    %v1967 = vld [vmem:[#allocation10 + $0x8] sm:$0xff]
    %v1968 = vld [vmem:[#allocation10 + $0x10] sm:$0xff]
    %v1969 = vld [vmem:[#allocation10 + $0x18] sm:$0xff]
    %v1970 = vld [vmem:[#allocation10 + $0x20] sm:$0xff]
    %v1971 = vld [vmem:[#allocation10 + $0x28] sm:$0xff]
    %v1972 = vld [vmem:[#allocation10 + $0x30] sm:$0xff]
    %v1973 = vld [vmem:[#allocation10 + $0x38] sm:$0xff]
    %v1974 = vpack.c.bf16 %v1966, %v1966
    %v1975 = vpack.c.bf16 %v1967, %v1967
    %v1976 = vpack.c.bf16 %v1968, %v1968
    %v1977 = vpack.c.bf16 %v1969, %v1969
    %v1978 = vpack.c.bf16 %v1970, %v1970
    %v1979 = vpack.c.bf16 %v1971, %v1971
    %v1980 = vpack.c.bf16 %v1972, %v1972
    %v1981 = vpack.c.bf16 %v1973, %v1973
    %1982 = vmatpush.bf16.msra.mxu0 %v556
    %1983 = vmatpush.bf16.msra.mxu0 %v555
    %1984 = vmatpush.bf16.msra.mxu0 %v554
    %1985 = vmatpush.bf16.msra.mxu0 %v553
    %1986 = vmatpush.bf16.msra.mxu0 %v552
    %1987 = vmatpush.bf16.msra.mxu0 %v551
    %1988 = vmatpush.bf16.msra.mxu0 %v550
    %1989 = vmatpush.bf16.msra.mxu0 %v549
    %1990 = vmatmul.bf16.gmra.mxu0 %v1974
    %v1991 = vpop.f32.mrf.mxu0
    %v1992 = vadd.f32 %v291, %v1991
    %v1993 = vpop.f32.mrf.mxu0
    %1994 = vdwg.mxu0
    %1995 = vmatpush.bf16.msra.mxu0 %v564
    %1996 = vmatpush.bf16.msra.mxu0 %v563
    %1997 = vmatpush.bf16.msra.mxu0 %v562
    %1998 = vmatpush.bf16.msra.mxu0 %v561
    %1999 = vmatpush.bf16.msra.mxu0 %v560
    %2000 = vmatpush.bf16.msra.mxu0 %v559
    %2001 = vmatpush.bf16.msra.mxu0 %v558
    %2002 = vmatpush.bf16.msra.mxu0 %v557
    %2003 = vmatmul.bf16.gmra.mxu0 %v1975
    %v2004 = vpop.f32.mrf.mxu0
    %v2005 = vadd.f32 %v1992, %v2004
    %v2006 = vpop.f32.mrf.mxu0
    %2007 = vdwg.mxu0
    %2008 = vmatpush.bf16.msra.mxu0 %v572
    %2009 = vmatpush.bf16.msra.mxu0 %v571
    %2010 = vmatpush.bf16.msra.mxu0 %v570
    %2011 = vmatpush.bf16.msra.mxu0 %v569
    %2012 = vmatpush.bf16.msra.mxu0 %v568
    %2013 = vmatpush.bf16.msra.mxu0 %v567
    %2014 = vmatpush.bf16.msra.mxu0 %v566
    %2015 = vmatpush.bf16.msra.mxu0 %v565
    %2016 = vmatmul.bf16.gmra.mxu0 %v1976
    %v2017 = vpop.f32.mrf.mxu0
    %v2018 = vadd.f32 %v2005, %v2017
    %v2019 = vpop.f32.mrf.mxu0
    %2020 = vdwg.mxu0
    %2021 = vmatpush.bf16.msra.mxu0 %v580
    %2022 = vmatpush.bf16.msra.mxu0 %v579
    %2023 = vmatpush.bf16.msra.mxu0 %v578
    %2024 = vmatpush.bf16.msra.mxu0 %v577
    %2025 = vmatpush.bf16.msra.mxu0 %v576
    %2026 = vmatpush.bf16.msra.mxu0 %v575
    %2027 = vmatpush.bf16.msra.mxu0 %v574
    %2028 = vmatpush.bf16.msra.mxu0 %v573
    %2029 = vmatmul.bf16.gmra.mxu0 %v1977
    %v2030 = vpop.f32.mrf.mxu0
    %v2031 = vadd.f32 %v2018, %v2030
    %v2032 = vpop.f32.mrf.mxu0
    %2033 = vdwg.mxu0
    %2034 = vmatpush.bf16.msra.mxu0 %v588
    %2035 = vmatpush.bf16.msra.mxu0 %v587
    %2036 = vmatpush.bf16.msra.mxu0 %v586
    %2037 = vmatpush.bf16.msra.mxu0 %v585
    %2038 = vmatpush.bf16.msra.mxu0 %v584
    %2039 = vmatpush.bf16.msra.mxu0 %v583
    %2040 = vmatpush.bf16.msra.mxu0 %v582
    %2041 = vmatpush.bf16.msra.mxu0 %v581
    %2042 = vmatmul.bf16.gmra.mxu0 %v1978
    %v2043 = vpop.f32.mrf.mxu0
    %v2044 = vadd.f32 %v2031, %v2043
    %v2045 = vpop.f32.mrf.mxu0
    %2046 = vdwg.mxu0
    %2047 = vmatpush.bf16.msra.mxu0 %v596
    %2048 = vmatpush.bf16.msra.mxu0 %v595
    %2049 = vmatpush.bf16.msra.mxu0 %v594
    %2050 = vmatpush.bf16.msra.mxu0 %v593
    %2051 = vmatpush.bf16.msra.mxu0 %v592
    %2052 = vmatpush.bf16.msra.mxu0 %v591
    %2053 = vmatpush.bf16.msra.mxu0 %v590
    %2054 = vmatpush.bf16.msra.mxu0 %v589
    %2055 = vmatmul.bf16.gmra.mxu0 %v1979
    %v2056 = vpop.f32.mrf.mxu0
    %v2057 = vadd.f32 %v2044, %v2056
    %v2058 = vpop.f32.mrf.mxu0
    %2059 = vdwg.mxu0
    %2060 = vmatpush.bf16.msra.mxu0 %v604
    %2061 = vmatpush.bf16.msra.mxu0 %v603
    %2062 = vmatpush.bf16.msra.mxu0 %v602
    %2063 = vmatpush.bf16.msra.mxu0 %v601
    %2064 = vmatpush.bf16.msra.mxu0 %v600
    %2065 = vmatpush.bf16.msra.mxu0 %v599
    %2066 = vmatpush.bf16.msra.mxu0 %v598
    %2067 = vmatpush.bf16.msra.mxu0 %v597
    %2068 = vmatmul.bf16.gmra.mxu0 %v1980
    %v2069 = vpop.f32.mrf.mxu0
    %v2070 = vadd.f32 %v2057, %v2069
    %v2071 = vpop.f32.mrf.mxu0
    %2072 = vdwg.mxu0
    %2073 = vmatpush.bf16.msra.mxu0 %v612
    %2074 = vmatpush.bf16.msra.mxu0 %v611
    %2075 = vmatpush.bf16.msra.mxu0 %v610
    %2076 = vmatpush.bf16.msra.mxu0 %v609
    %2077 = vmatpush.bf16.msra.mxu0 %v608
    %2078 = vmatpush.bf16.msra.mxu0 %v607
    %2079 = vmatpush.bf16.msra.mxu0 %v606
    %2080 = vmatpush.bf16.msra.mxu0 %v605
    %2081 = vmatmul.bf16.gmra.mxu0 %v1981
    %v2082 = vpop.f32.mrf.mxu0
    %v2083 = vadd.f32 %v2070, %v2082
    %v2084 = vpop.f32.mrf.mxu0
    %2085 = vdwg.mxu0
    %v2086 = vtanh.pop %v2083
    %v2087 = vpack.c.bf16 %v2086, %v2086
    %2088 = vmatpush.bf16.msra.mxu0 %v1048
    %2089 = vmatpush.bf16.msra.mxu0 %v1040
    %2090 = vmatpush.bf16.msra.mxu0 %v1032
    %2091 = vmatpush.bf16.msra.mxu0 %v1024
    %2092 = vmatpush.bf16.msra.mxu0 %v1016
    %2093 = vmatpush.bf16.msra.mxu0 %v1008
    %2094 = vmatpush.bf16.msra.mxu0 %v1000
    %2095 = vmatpush.bf16.msra.mxu0 %v992
    %2096 = vmatmul.bf16.gmra.mxu0 %v2087
    %v2097 = vpop.f32.mrf.mxu0
    %v2098 = vadd.f32 %v784, %v2097
    %v2099 = vpop.f32.mrf.mxu0
    %2100 = vdwg.mxu0
    %2101 = vmatpush.bf16.msra.mxu0 %v1049
    %2102 = vmatpush.bf16.msra.mxu0 %v1041
    %2103 = vmatpush.bf16.msra.mxu0 %v1033
    %2104 = vmatpush.bf16.msra.mxu0 %v1025
    %2105 = vmatpush.bf16.msra.mxu0 %v1017
    %2106 = vmatpush.bf16.msra.mxu0 %v1009
    %2107 = vmatpush.bf16.msra.mxu0 %v1001
    %2108 = vmatpush.bf16.msra.mxu0 %v993
    %2109 = vmatmul.bf16.gmra.mxu0 %v2087
    %v2110 = vpop.f32.mrf.mxu0
    %v2111 = vadd.f32 %v785, %v2110
    %v2112 = vpop.f32.mrf.mxu0
    %2113 = vdwg.mxu0
    %2114 = vmatpush.bf16.msra.mxu0 %v1050
    %2115 = vmatpush.bf16.msra.mxu0 %v1042
    %2116 = vmatpush.bf16.msra.mxu0 %v1034
    %2117 = vmatpush.bf16.msra.mxu0 %v1026
    %2118 = vmatpush.bf16.msra.mxu0 %v1018
    %2119 = vmatpush.bf16.msra.mxu0 %v1010
    %2120 = vmatpush.bf16.msra.mxu0 %v1002
    %2121 = vmatpush.bf16.msra.mxu0 %v994
    %2122 = vmatmul.bf16.gmra.mxu0 %v2087
    %v2123 = vpop.f32.mrf.mxu0
    %v2124 = vadd.f32 %v786, %v2123
    %v2125 = vpop.f32.mrf.mxu0
    %2126 = vdwg.mxu0
    %2127 = vmatpush.bf16.msra.mxu0 %v1051
    %2128 = vmatpush.bf16.msra.mxu0 %v1043
    %2129 = vmatpush.bf16.msra.mxu0 %v1035
    %2130 = vmatpush.bf16.msra.mxu0 %v1027
    %2131 = vmatpush.bf16.msra.mxu0 %v1019
    %2132 = vmatpush.bf16.msra.mxu0 %v1011
    %2133 = vmatpush.bf16.msra.mxu0 %v1003
    %2134 = vmatpush.bf16.msra.mxu0 %v995
    %2135 = vmatmul.bf16.gmra.mxu0 %v2087
    %v2136 = vpop.f32.mrf.mxu0
    %v2137 = vadd.f32 %v787, %v2136
    %v2138 = vpop.f32.mrf.mxu0
    %2139 = vdwg.mxu0
    %2140 = vmatpush.bf16.msra.mxu0 %v1052
    %2141 = vmatpush.bf16.msra.mxu0 %v1044
    %2142 = vmatpush.bf16.msra.mxu0 %v1036
    %2143 = vmatpush.bf16.msra.mxu0 %v1028
    %2144 = vmatpush.bf16.msra.mxu0 %v1020
    %2145 = vmatpush.bf16.msra.mxu0 %v1012
    %2146 = vmatpush.bf16.msra.mxu0 %v1004
    %2147 = vmatpush.bf16.msra.mxu0 %v996
    %2148 = vmatmul.bf16.gmra.mxu0 %v2087
    %v2149 = vpop.f32.mrf.mxu0
    %v2150 = vadd.f32 %v788, %v2149
    %v2151 = vpop.f32.mrf.mxu0
    %2152 = vdwg.mxu0
    %2153 = vmatpush.bf16.msra.mxu0 %v1053
    %2154 = vmatpush.bf16.msra.mxu0 %v1045
    %2155 = vmatpush.bf16.msra.mxu0 %v1037
    %2156 = vmatpush.bf16.msra.mxu0 %v1029
    %2157 = vmatpush.bf16.msra.mxu0 %v1021
    %2158 = vmatpush.bf16.msra.mxu0 %v1013
    %2159 = vmatpush.bf16.msra.mxu0 %v1005
    %2160 = vmatpush.bf16.msra.mxu0 %v997
    %2161 = vmatmul.bf16.gmra.mxu0 %v2087
    %v2162 = vpop.f32.mrf.mxu0
    %v2163 = vadd.f32 %v789, %v2162
    %v2164 = vpop.f32.mrf.mxu0
    %2165 = vdwg.mxu0
    %2166 = vmatpush.bf16.msra.mxu0 %v1054
    %2167 = vmatpush.bf16.msra.mxu0 %v1046
    %2168 = vmatpush.bf16.msra.mxu0 %v1038
    %2169 = vmatpush.bf16.msra.mxu0 %v1030
    %2170 = vmatpush.bf16.msra.mxu0 %v1022
    %2171 = vmatpush.bf16.msra.mxu0 %v1014
    %2172 = vmatpush.bf16.msra.mxu0 %v1006
    %2173 = vmatpush.bf16.msra.mxu0 %v998
    %2174 = vmatmul.bf16.gmra.mxu0 %v2087
    %v2175 = vpop.f32.mrf.mxu0
    %v2176 = vadd.f32 %v790, %v2175
    %v2177 = vpop.f32.mrf.mxu0
    %2178 = vdwg.mxu0
    %2179 = vmatpush.bf16.msra.mxu0 %v1055
    %2180 = vmatpush.bf16.msra.mxu0 %v1047
    %2181 = vmatpush.bf16.msra.mxu0 %v1039
    %2182 = vmatpush.bf16.msra.mxu0 %v1031
    %2183 = vmatpush.bf16.msra.mxu0 %v1023
    %2184 = vmatpush.bf16.msra.mxu0 %v1015
    %2185 = vmatpush.bf16.msra.mxu0 %v1007
    %2186 = vmatpush.bf16.msra.mxu0 %v999
    %2187 = vmatmul.bf16.gmra.mxu0 %v2087
    %v2188 = vpop.f32.mrf.mxu0
    %v2189 = vadd.f32 %v791, %v2188
    %v2190 = vpop.f32.mrf.mxu0
    %2191 = vdwg.mxu0
    %v2192 = vadd.f32 %v1966, %v2098
    %v2193 = vadd.f32 %v1967, %v2111
    %v2194 = vadd.f32 %v1968, %v2124
    %v2195 = vadd.f32 %v1969, %v2137
    %v2196 = vadd.f32 %v1970, %v2150
    %v2197 = vadd.f32 %v1971, %v2163
    %v2198 = vadd.f32 %v1972, %v2176
    %v2199 = vadd.f32 %v1973, %v2189
    %2200 = vst [vmem:[#allocation10] sm:$0xff] %v2192
    %2201 = vst [vmem:[#allocation10 + $0x8] sm:$0xff] %v2193
    %2202 = vst [vmem:[#allocation10 + $0x10] sm:$0xff] %v2194
    %2203 = vst [vmem:[#allocation10 + $0x18] sm:$0xff] %v2195
    %2204 = vst [vmem:[#allocation10 + $0x20] sm:$0xff] %v2196
    %2205 = vst [vmem:[#allocation10 + $0x28] sm:$0xff] %v2197
    %2206 = vst [vmem:[#allocation10 + $0x30] sm:$0xff] %v2198
    %2207 = vst [vmem:[#allocation10 + $0x38] sm:$0xff] %v2199
    %v2208 = vld [vmem:[#allocation10] sm:$0xff]
    %v2209 = vld [vmem:[#allocation10 + $0x8] sm:$0xff]
    %v2210 = vld [vmem:[#allocation10 + $0x10] sm:$0xff]
    %v2211 = vld [vmem:[#allocation10 + $0x18] sm:$0xff]
    %v2212 = vld [vmem:[#allocation10 + $0x20] sm:$0xff]
    %v2213 = vld [vmem:[#allocation10 + $0x28] sm:$0xff]
    %v2214 = vld [vmem:[#allocation10 + $0x30] sm:$0xff]
    %v2215 = vld [vmem:[#allocation10 + $0x38] sm:$0xff]
    %v2216 = vpack.c.bf16 %v2208, %v2208
    %v2217 = vpack.c.bf16 %v2209, %v2209
    %v2218 = vpack.c.bf16 %v2210, %v2210
    %v2219 = vpack.c.bf16 %v2211, %v2211
    %v2220 = vpack.c.bf16 %v2212, %v2212
    %v2221 = vpack.c.bf16 %v2213, %v2213
    %v2222 = vpack.c.bf16 %v2214, %v2214
    %v2223 = vpack.c.bf16 %v2215, %v2215
    %2224 = vmatpush.bf16.msra.mxu0 %v556
    %2225 = vmatpush.bf16.msra.mxu0 %v555
    %2226 = vmatpush.bf16.msra.mxu0 %v554
    %2227 = vmatpush.bf16.msra.mxu0 %v553
    %2228 = vmatpush.bf16.msra.mxu0 %v552
    %2229 = vmatpush.bf16.msra.mxu0 %v551
    %2230 = vmatpush.bf16.msra.mxu0 %v550
    %2231 = vmatpush.bf16.msra.mxu0 %v549
    %2232 = vmatmul.bf16.gmra.mxu0 %v2216
    %v2233 = vpop.f32.mrf.mxu0
    %v2234 = vadd.f32 %v291, %v2233
    %v2235 = vpop.f32.mrf.mxu0
    %2236 = vdwg.mxu0
    %2237 = vmatpush.bf16.msra.mxu0 %v564
    %2238 = vmatpush.bf16.msra.mxu0 %v563
    %2239 = vmatpush.bf16.msra.mxu0 %v562
    %2240 = vmatpush.bf16.msra.mxu0 %v561
    %2241 = vmatpush.bf16.msra.mxu0 %v560
    %2242 = vmatpush.bf16.msra.mxu0 %v559
    %2243 = vmatpush.bf16.msra.mxu0 %v558
    %2244 = vmatpush.bf16.msra.mxu0 %v557
    %2245 = vmatmul.bf16.gmra.mxu0 %v2217
    %v2246 = vpop.f32.mrf.mxu0
    %v2247 = vadd.f32 %v2234, %v2246
    %v2248 = vpop.f32.mrf.mxu0
    %2249 = vdwg.mxu0
    %2250 = vmatpush.bf16.msra.mxu0 %v572
    %2251 = vmatpush.bf16.msra.mxu0 %v571
    %2252 = vmatpush.bf16.msra.mxu0 %v570
    %2253 = vmatpush.bf16.msra.mxu0 %v569
    %2254 = vmatpush.bf16.msra.mxu0 %v568
    %2255 = vmatpush.bf16.msra.mxu0 %v567
    %2256 = vmatpush.bf16.msra.mxu0 %v566
    %2257 = vmatpush.bf16.msra.mxu0 %v565
    %2258 = vmatmul.bf16.gmra.mxu0 %v2218
    %v2259 = vpop.f32.mrf.mxu0
    %v2260 = vadd.f32 %v2247, %v2259
    %v2261 = vpop.f32.mrf.mxu0
    %2262 = vdwg.mxu0
    %2263 = vmatpush.bf16.msra.mxu0 %v580
    %2264 = vmatpush.bf16.msra.mxu0 %v579
    %2265 = vmatpush.bf16.msra.mxu0 %v578
    %2266 = vmatpush.bf16.msra.mxu0 %v577
    %2267 = vmatpush.bf16.msra.mxu0 %v576
    %2268 = vmatpush.bf16.msra.mxu0 %v575
    %2269 = vmatpush.bf16.msra.mxu0 %v574
    %2270 = vmatpush.bf16.msra.mxu0 %v573
    %2271 = vmatmul.bf16.gmra.mxu0 %v2219
    %v2272 = vpop.f32.mrf.mxu0
    %v2273 = vadd.f32 %v2260, %v2272
    %v2274 = vpop.f32.mrf.mxu0
    %2275 = vdwg.mxu0
    %2276 = vmatpush.bf16.msra.mxu0 %v588
    %2277 = vmatpush.bf16.msra.mxu0 %v587
    %2278 = vmatpush.bf16.msra.mxu0 %v586
    %2279 = vmatpush.bf16.msra.mxu0 %v585
    %2280 = vmatpush.bf16.msra.mxu0 %v584
    %2281 = vmatpush.bf16.msra.mxu0 %v583
    %2282 = vmatpush.bf16.msra.mxu0 %v582
    %2283 = vmatpush.bf16.msra.mxu0 %v581
    %2284 = vmatmul.bf16.gmra.mxu0 %v2220
    %v2285 = vpop.f32.mrf.mxu0
    %v2286 = vadd.f32 %v2273, %v2285
    %v2287 = vpop.f32.mrf.mxu0
    %2288 = vdwg.mxu0
    %2289 = vmatpush.bf16.msra.mxu0 %v596
    %2290 = vmatpush.bf16.msra.mxu0 %v595
    %2291 = vmatpush.bf16.msra.mxu0 %v594
    %2292 = vmatpush.bf16.msra.mxu0 %v593
    %2293 = vmatpush.bf16.msra.mxu0 %v592
    %2294 = vmatpush.bf16.msra.mxu0 %v591
    %2295 = vmatpush.bf16.msra.mxu0 %v590
    %2296 = vmatpush.bf16.msra.mxu0 %v589
    %2297 = vmatmul.bf16.gmra.mxu0 %v2221
    %v2298 = vpop.f32.mrf.mxu0
    %v2299 = vadd.f32 %v2286, %v2298
    %v2300 = vpop.f32.mrf.mxu0
    %2301 = vdwg.mxu0
    %2302 = vmatpush.bf16.msra.mxu0 %v604
    %2303 = vmatpush.bf16.msra.mxu0 %v603
    %2304 = vmatpush.bf16.msra.mxu0 %v602
    %2305 = vmatpush.bf16.msra.mxu0 %v601
    %2306 = vmatpush.bf16.msra.mxu0 %v600
    %2307 = vmatpush.bf16.msra.mxu0 %v599
    %2308 = vmatpush.bf16.msra.mxu0 %v598
    %2309 = vmatpush.bf16.msra.mxu0 %v597
    %2310 = vmatmul.bf16.gmra.mxu0 %v2222
    %v2311 = vpop.f32.mrf.mxu0
    %v2312 = vadd.f32 %v2299, %v2311
    %v2313 = vpop.f32.mrf.mxu0
    %2314 = vdwg.mxu0
    %2315 = vmatpush.bf16.msra.mxu0 %v612
    %2316 = vmatpush.bf16.msra.mxu0 %v611
    %2317 = vmatpush.bf16.msra.mxu0 %v610
    %2318 = vmatpush.bf16.msra.mxu0 %v609
    %2319 = vmatpush.bf16.msra.mxu0 %v608
    %2320 = vmatpush.bf16.msra.mxu0 %v607
    %2321 = vmatpush.bf16.msra.mxu0 %v606
    %2322 = vmatpush.bf16.msra.mxu0 %v605
    %2323 = vmatmul.bf16.gmra.mxu0 %v2223
    %v2324 = vpop.f32.mrf.mxu0
    %v2325 = vadd.f32 %v2312, %v2324
    %v2326 = vpop.f32.mrf.mxu0
    %2327 = vdwg.mxu0
    %v2328 = vtanh.pop %v2325
    %v2329 = vpack.c.bf16 %v2328, %v2328
    %2330 = vmatpush.bf16.msra.mxu0 %v1048
    %2331 = vmatpush.bf16.msra.mxu0 %v1040
    %2332 = vmatpush.bf16.msra.mxu0 %v1032
    %2333 = vmatpush.bf16.msra.mxu0 %v1024
    %2334 = vmatpush.bf16.msra.mxu0 %v1016
    %2335 = vmatpush.bf16.msra.mxu0 %v1008
    %2336 = vmatpush.bf16.msra.mxu0 %v1000
    %2337 = vmatpush.bf16.msra.mxu0 %v992
    %2338 = vmatmul.bf16.gmra.mxu0 %v2329
    %v2339 = vpop.f32.mrf.mxu0
    %v2340 = vadd.f32 %v784, %v2339
    %v2341 = vpop.f32.mrf.mxu0
    %2342 = vdwg.mxu0
    %2343 = vmatpush.bf16.msra.mxu0 %v1049
    %2344 = vmatpush.bf16.msra.mxu0 %v1041
    %2345 = vmatpush.bf16.msra.mxu0 %v1033
    %2346 = vmatpush.bf16.msra.mxu0 %v1025
    %2347 = vmatpush.bf16.msra.mxu0 %v1017
    %2348 = vmatpush.bf16.msra.mxu0 %v1009
    %2349 = vmatpush.bf16.msra.mxu0 %v1001
    %2350 = vmatpush.bf16.msra.mxu0 %v993
    %2351 = vmatmul.bf16.gmra.mxu0 %v2329
    %v2352 = vpop.f32.mrf.mxu0
    %v2353 = vadd.f32 %v785, %v2352
    %v2354 = vpop.f32.mrf.mxu0
    %2355 = vdwg.mxu0
    %2356 = vmatpush.bf16.msra.mxu0 %v1050
    %2357 = vmatpush.bf16.msra.mxu0 %v1042
    %2358 = vmatpush.bf16.msra.mxu0 %v1034
    %2359 = vmatpush.bf16.msra.mxu0 %v1026
    %2360 = vmatpush.bf16.msra.mxu0 %v1018
    %2361 = vmatpush.bf16.msra.mxu0 %v1010
    %2362 = vmatpush.bf16.msra.mxu0 %v1002
    %2363 = vmatpush.bf16.msra.mxu0 %v994
    %2364 = vmatmul.bf16.gmra.mxu0 %v2329
    %v2365 = vpop.f32.mrf.mxu0
    %v2366 = vadd.f32 %v786, %v2365
    %v2367 = vpop.f32.mrf.mxu0
    %2368 = vdwg.mxu0
    %2369 = vmatpush.bf16.msra.mxu0 %v1051
    %2370 = vmatpush.bf16.msra.mxu0 %v1043
    %2371 = vmatpush.bf16.msra.mxu0 %v1035
    %2372 = vmatpush.bf16.msra.mxu0 %v1027
    %2373 = vmatpush.bf16.msra.mxu0 %v1019
    %2374 = vmatpush.bf16.msra.mxu0 %v1011
    %2375 = vmatpush.bf16.msra.mxu0 %v1003
    %2376 = vmatpush.bf16.msra.mxu0 %v995
    %2377 = vmatmul.bf16.gmra.mxu0 %v2329
    %v2378 = vpop.f32.mrf.mxu0
    %v2379 = vadd.f32 %v787, %v2378
    %v2380 = vpop.f32.mrf.mxu0
    %2381 = vdwg.mxu0
    %2382 = vmatpush.bf16.msra.mxu0 %v1052
    %2383 = vmatpush.bf16.msra.mxu0 %v1044
    %2384 = vmatpush.bf16.msra.mxu0 %v1036
    %2385 = vmatpush.bf16.msra.mxu0 %v1028
    %2386 = vmatpush.bf16.msra.mxu0 %v1020
    %2387 = vmatpush.bf16.msra.mxu0 %v1012
    %2388 = vmatpush.bf16.msra.mxu0 %v1004
    %2389 = vmatpush.bf16.msra.mxu0 %v996
    %2390 = vmatmul.bf16.gmra.mxu0 %v2329
    %v2391 = vpop.f32.mrf.mxu0
    %v2392 = vadd.f32 %v788, %v2391
    %v2393 = vpop.f32.mrf.mxu0
    %2394 = vdwg.mxu0
    %2395 = vmatpush.bf16.msra.mxu0 %v1053
    %2396 = vmatpush.bf16.msra.mxu0 %v1045
    %2397 = vmatpush.bf16.msra.mxu0 %v1037
    %2398 = vmatpush.bf16.msra.mxu0 %v1029
    %2399 = vmatpush.bf16.msra.mxu0 %v1021
    %2400 = vmatpush.bf16.msra.mxu0 %v1013
    %2401 = vmatpush.bf16.msra.mxu0 %v1005
    %2402 = vmatpush.bf16.msra.mxu0 %v997
    %2403 = vmatmul.bf16.gmra.mxu0 %v2329
    %v2404 = vpop.f32.mrf.mxu0
    %v2405 = vadd.f32 %v789, %v2404
    %v2406 = vpop.f32.mrf.mxu0
    %2407 = vdwg.mxu0
    %2408 = vmatpush.bf16.msra.mxu0 %v1054
    %2409 = vmatpush.bf16.msra.mxu0 %v1046
    %2410 = vmatpush.bf16.msra.mxu0 %v1038
    %2411 = vmatpush.bf16.msra.mxu0 %v1030
    %2412 = vmatpush.bf16.msra.mxu0 %v1022
    %2413 = vmatpush.bf16.msra.mxu0 %v1014
    %2414 = vmatpush.bf16.msra.mxu0 %v1006
    %2415 = vmatpush.bf16.msra.mxu0 %v998
    %2416 = vmatmul.bf16.gmra.mxu0 %v2329
    %v2417 = vpop.f32.mrf.mxu0
    %v2418 = vadd.f32 %v790, %v2417
    %v2419 = vpop.f32.mrf.mxu0
    %2420 = vdwg.mxu0
    %2421 = vmatpush.bf16.msra.mxu0 %v1055
    %2422 = vmatpush.bf16.msra.mxu0 %v1047
    %2423 = vmatpush.bf16.msra.mxu0 %v1039
    %2424 = vmatpush.bf16.msra.mxu0 %v1031
    %2425 = vmatpush.bf16.msra.mxu0 %v1023
    %2426 = vmatpush.bf16.msra.mxu0 %v1015
    %2427 = vmatpush.bf16.msra.mxu0 %v1007
    %2428 = vmatpush.bf16.msra.mxu0 %v999
    %2429 = vmatmul.bf16.gmra.mxu0 %v2329
    %v2430 = vpop.f32.mrf.mxu0
    %v2431 = vadd.f32 %v791, %v2430
    %v2432 = vpop.f32.mrf.mxu0
    %2433 = vdwg.mxu0
    %v2434 = vadd.f32 %v2208, %v2340
    %v2435 = vadd.f32 %v2209, %v2353
    %v2436 = vadd.f32 %v2210, %v2366
    %v2437 = vadd.f32 %v2211, %v2379
    %v2438 = vadd.f32 %v2212, %v2392
    %v2439 = vadd.f32 %v2213, %v2405
    %v2440 = vadd.f32 %v2214, %v2418
    %v2441 = vadd.f32 %v2215, %v2431
    %2442 = vst [vmem:[#allocation10] sm:$0xff] %v2434
    %2443 = vst [vmem:[#allocation10 + $0x8] sm:$0xff] %v2435
    %2444 = vst [vmem:[#allocation10 + $0x10] sm:$0xff] %v2436
    %2445 = vst [vmem:[#allocation10 + $0x18] sm:$0xff] %v2437
    %2446 = vst [vmem:[#allocation10 + $0x20] sm:$0xff] %v2438
    %2447 = vst [vmem:[#allocation10 + $0x28] sm:$0xff] %v2439
    %2448 = vst [vmem:[#allocation10 + $0x30] sm:$0xff] %v2440
    %2449 = vst [vmem:[#allocation10 + $0x38] sm:$0xff] %v2441
    %v2450 = vld [vmem:[#allocation10] sm:$0xff]
    %v2451 = vld [vmem:[#allocation10 + $0x8] sm:$0xff]
    %v2452 = vld [vmem:[#allocation10 + $0x10] sm:$0xff]
    %v2453 = vld [vmem:[#allocation10 + $0x18] sm:$0xff]
    %v2454 = vld [vmem:[#allocation10 + $0x20] sm:$0xff]
    %v2455 = vld [vmem:[#allocation10 + $0x28] sm:$0xff]
    %v2456 = vld [vmem:[#allocation10 + $0x30] sm:$0xff]
    %v2457 = vld [vmem:[#allocation10 + $0x38] sm:$0xff]
    %v2458 = vpack.c.bf16 %v2450, %v2450
    %v2459 = vpack.c.bf16 %v2451, %v2451
    %v2460 = vpack.c.bf16 %v2452, %v2452
    %v2461 = vpack.c.bf16 %v2453, %v2453
    %v2462 = vpack.c.bf16 %v2454, %v2454
    %v2463 = vpack.c.bf16 %v2455, %v2455
    %v2464 = vpack.c.bf16 %v2456, %v2456
    %v2465 = vpack.c.bf16 %v2457, %v2457
    %2466 = vmatpush.bf16.msra.mxu0 %v556
    %2467 = vmatpush.bf16.msra.mxu0 %v555
    %2468 = vmatpush.bf16.msra.mxu0 %v554
    %2469 = vmatpush.bf16.msra.mxu0 %v553
    %2470 = vmatpush.bf16.msra.mxu0 %v552
    %2471 = vmatpush.bf16.msra.mxu0 %v551
    %2472 = vmatpush.bf16.msra.mxu0 %v550
    %2473 = vmatpush.bf16.msra.mxu0 %v549
    %2474 = vmatmul.bf16.gmra.mxu0 %v2458
    %v2475 = vpop.f32.mrf.mxu0
    %v2476 = vadd.f32 %v291, %v2475
    %v2477 = vpop.f32.mrf.mxu0
    %2478 = vdwg.mxu0
    %2479 = vmatpush.bf16.msra.mxu0 %v564
    %2480 = vmatpush.bf16.msra.mxu0 %v563
    %2481 = vmatpush.bf16.msra.mxu0 %v562
    %2482 = vmatpush.bf16.msra.mxu0 %v561
    %2483 = vmatpush.bf16.msra.mxu0 %v560
    %2484 = vmatpush.bf16.msra.mxu0 %v559
    %2485 = vmatpush.bf16.msra.mxu0 %v558
    %2486 = vmatpush.bf16.msra.mxu0 %v557
    %2487 = vmatmul.bf16.gmra.mxu0 %v2459
    %v2488 = vpop.f32.mrf.mxu0
    %v2489 = vadd.f32 %v2476, %v2488
    %v2490 = vpop.f32.mrf.mxu0
    %2491 = vdwg.mxu0
    %2492 = vmatpush.bf16.msra.mxu0 %v572
    %2493 = vmatpush.bf16.msra.mxu0 %v571
    %2494 = vmatpush.bf16.msra.mxu0 %v570
    %2495 = vmatpush.bf16.msra.mxu0 %v569
    %2496 = vmatpush.bf16.msra.mxu0 %v568
    %2497 = vmatpush.bf16.msra.mxu0 %v567
    %2498 = vmatpush.bf16.msra.mxu0 %v566
    %2499 = vmatpush.bf16.msra.mxu0 %v565
    %2500 = vmatmul.bf16.gmra.mxu0 %v2460
    %v2501 = vpop.f32.mrf.mxu0
    %v2502 = vadd.f32 %v2489, %v2501
    %v2503 = vpop.f32.mrf.mxu0
    %2504 = vdwg.mxu0
    %2505 = vmatpush.bf16.msra.mxu0 %v580
    %2506 = vmatpush.bf16.msra.mxu0 %v579
    %2507 = vmatpush.bf16.msra.mxu0 %v578
    %2508 = vmatpush.bf16.msra.mxu0 %v577
    %2509 = vmatpush.bf16.msra.mxu0 %v576
    %2510 = vmatpush.bf16.msra.mxu0 %v575
    %2511 = vmatpush.bf16.msra.mxu0 %v574
    %2512 = vmatpush.bf16.msra.mxu0 %v573
    %2513 = vmatmul.bf16.gmra.mxu0 %v2461
    %v2514 = vpop.f32.mrf.mxu0
    %v2515 = vadd.f32 %v2502, %v2514
    %v2516 = vpop.f32.mrf.mxu0
    %2517 = vdwg.mxu0
    %2518 = vmatpush.bf16.msra.mxu0 %v588
    %2519 = vmatpush.bf16.msra.mxu0 %v587
    %2520 = vmatpush.bf16.msra.mxu0 %v586
    %2521 = vmatpush.bf16.msra.mxu0 %v585
    %2522 = vmatpush.bf16.msra.mxu0 %v584
    %2523 = vmatpush.bf16.msra.mxu0 %v583
    %2524 = vmatpush.bf16.msra.mxu0 %v582
    %2525 = vmatpush.bf16.msra.mxu0 %v581
    %2526 = vmatmul.bf16.gmra.mxu0 %v2462
    %v2527 = vpop.f32.mrf.mxu0
    %v2528 = vadd.f32 %v2515, %v2527
    %v2529 = vpop.f32.mrf.mxu0
    %2530 = vdwg.mxu0
    %2531 = vmatpush.bf16.msra.mxu0 %v596
    %2532 = vmatpush.bf16.msra.mxu0 %v595
    %2533 = vmatpush.bf16.msra.mxu0 %v594
    %2534 = vmatpush.bf16.msra.mxu0 %v593
    %2535 = vmatpush.bf16.msra.mxu0 %v592
    %2536 = vmatpush.bf16.msra.mxu0 %v591
    %2537 = vmatpush.bf16.msra.mxu0 %v590
    %2538 = vmatpush.bf16.msra.mxu0 %v589
    %2539 = vmatmul.bf16.gmra.mxu0 %v2463
    %v2540 = vpop.f32.mrf.mxu0
    %v2541 = vadd.f32 %v2528, %v2540
    %v2542 = vpop.f32.mrf.mxu0
    %2543 = vdwg.mxu0
    %2544 = vmatpush.bf16.msra.mxu0 %v604
    %2545 = vmatpush.bf16.msra.mxu0 %v603
    %2546 = vmatpush.bf16.msra.mxu0 %v602
    %2547 = vmatpush.bf16.msra.mxu0 %v601
    %2548 = vmatpush.bf16.msra.mxu0 %v600
    %2549 = vmatpush.bf16.msra.mxu0 %v599
    %2550 = vmatpush.bf16.msra.mxu0 %v598
    %2551 = vmatpush.bf16.msra.mxu0 %v597
    %2552 = vmatmul.bf16.gmra.mxu0 %v2464
    %v2553 = vpop.f32.mrf.mxu0
    %v2554 = vadd.f32 %v2541, %v2553
    %v2555 = vpop.f32.mrf.mxu0
    %2556 = vdwg.mxu0
    %2557 = vmatpush.bf16.msra.mxu0 %v612
    %2558 = vmatpush.bf16.msra.mxu0 %v611
    %2559 = vmatpush.bf16.msra.mxu0 %v610
    %2560 = vmatpush.bf16.msra.mxu0 %v609
    %2561 = vmatpush.bf16.msra.mxu0 %v608
    %2562 = vmatpush.bf16.msra.mxu0 %v607
    %2563 = vmatpush.bf16.msra.mxu0 %v606
    %2564 = vmatpush.bf16.msra.mxu0 %v605
    %2565 = vmatmul.bf16.gmra.mxu0 %v2465
    %v2566 = vpop.f32.mrf.mxu0
    %v2567 = vadd.f32 %v2554, %v2566
    %v2568 = vpop.f32.mrf.mxu0
    %2569 = vdwg.mxu0
    %v2570 = vtanh.pop %v2567
    %v2571 = vpack.c.bf16 %v2570, %v2570
    %2572 = vmatpush.bf16.msra.mxu0 %v1048
    %2573 = vmatpush.bf16.msra.mxu0 %v1040
    %2574 = vmatpush.bf16.msra.mxu0 %v1032
    %2575 = vmatpush.bf16.msra.mxu0 %v1024
    %2576 = vmatpush.bf16.msra.mxu0 %v1016
    %2577 = vmatpush.bf16.msra.mxu0 %v1008
    %2578 = vmatpush.bf16.msra.mxu0 %v1000
    %2579 = vmatpush.bf16.msra.mxu0 %v992
    %2580 = vmatmul.bf16.gmra.mxu0 %v2571
    %v2581 = vpop.f32.mrf.mxu0
    %v2582 = vadd.f32 %v784, %v2581
    %v2583 = vpop.f32.mrf.mxu0
    %2584 = vdwg.mxu0
    %2585 = vmatpush.bf16.msra.mxu0 %v1049
    %2586 = vmatpush.bf16.msra.mxu0 %v1041
    %2587 = vmatpush.bf16.msra.mxu0 %v1033
    %2588 = vmatpush.bf16.msra.mxu0 %v1025
    %2589 = vmatpush.bf16.msra.mxu0 %v1017
    %2590 = vmatpush.bf16.msra.mxu0 %v1009
    %2591 = vmatpush.bf16.msra.mxu0 %v1001
    %2592 = vmatpush.bf16.msra.mxu0 %v993
    %2593 = vmatmul.bf16.gmra.mxu0 %v2571
    %v2594 = vpop.f32.mrf.mxu0
    %v2595 = vadd.f32 %v785, %v2594
    %v2596 = vpop.f32.mrf.mxu0
    %2597 = vdwg.mxu0
    %2598 = vmatpush.bf16.msra.mxu0 %v1050
    %2599 = vmatpush.bf16.msra.mxu0 %v1042
    %2600 = vmatpush.bf16.msra.mxu0 %v1034
    %2601 = vmatpush.bf16.msra.mxu0 %v1026
    %2602 = vmatpush.bf16.msra.mxu0 %v1018
    %2603 = vmatpush.bf16.msra.mxu0 %v1010
    %2604 = vmatpush.bf16.msra.mxu0 %v1002
    %2605 = vmatpush.bf16.msra.mxu0 %v994
    %2606 = vmatmul.bf16.gmra.mxu0 %v2571
    %v2607 = vpop.f32.mrf.mxu0
    %v2608 = vadd.f32 %v786, %v2607
    %v2609 = vpop.f32.mrf.mxu0
    %2610 = vdwg.mxu0
    %2611 = vmatpush.bf16.msra.mxu0 %v1051
    %2612 = vmatpush.bf16.msra.mxu0 %v1043
    %2613 = vmatpush.bf16.msra.mxu0 %v1035
    %2614 = vmatpush.bf16.msra.mxu0 %v1027
    %2615 = vmatpush.bf16.msra.mxu0 %v1019
    %2616 = vmatpush.bf16.msra.mxu0 %v1011
    %2617 = vmatpush.bf16.msra.mxu0 %v1003
    %2618 = vmatpush.bf16.msra.mxu0 %v995
    %2619 = vmatmul.bf16.gmra.mxu0 %v2571
    %v2620 = vpop.f32.mrf.mxu0
    %v2621 = vadd.f32 %v787, %v2620
    %v2622 = vpop.f32.mrf.mxu0
    %2623 = vdwg.mxu0
    %2624 = vmatpush.bf16.msra.mxu0 %v1052
    %2625 = vmatpush.bf16.msra.mxu0 %v1044
    %2626 = vmatpush.bf16.msra.mxu0 %v1036
    %2627 = vmatpush.bf16.msra.mxu0 %v1028
    %2628 = vmatpush.bf16.msra.mxu0 %v1020
    %2629 = vmatpush.bf16.msra.mxu0 %v1012
    %2630 = vmatpush.bf16.msra.mxu0 %v1004
    %2631 = vmatpush.bf16.msra.mxu0 %v996
    %2632 = vmatmul.bf16.gmra.mxu0 %v2571
    %v2633 = vpop.f32.mrf.mxu0
    %v2634 = vadd.f32 %v788, %v2633
    %v2635 = vpop.f32.mrf.mxu0
    %2636 = vdwg.mxu0
    %2637 = vmatpush.bf16.msra.mxu0 %v1053
    %2638 = vmatpush.bf16.msra.mxu0 %v1045
    %2639 = vmatpush.bf16.msra.mxu0 %v1037
    %2640 = vmatpush.bf16.msra.mxu0 %v1029
    %2641 = vmatpush.bf16.msra.mxu0 %v1021
    %2642 = vmatpush.bf16.msra.mxu0 %v1013
    %2643 = vmatpush.bf16.msra.mxu0 %v1005
    %2644 = vmatpush.bf16.msra.mxu0 %v997
    %2645 = vmatmul.bf16.gmra.mxu0 %v2571
    %v2646 = vpop.f32.mrf.mxu0
    %v2647 = vadd.f32 %v789, %v2646
    %v2648 = vpop.f32.mrf.mxu0
    %2649 = vdwg.mxu0
    %2650 = vmatpush.bf16.msra.mxu0 %v1054
    %2651 = vmatpush.bf16.msra.mxu0 %v1046
    %2652 = vmatpush.bf16.msra.mxu0 %v1038
    %2653 = vmatpush.bf16.msra.mxu0 %v1030
    %2654 = vmatpush.bf16.msra.mxu0 %v1022
    %2655 = vmatpush.bf16.msra.mxu0 %v1014
    %2656 = vmatpush.bf16.msra.mxu0 %v1006
    %2657 = vmatpush.bf16.msra.mxu0 %v998
    %2658 = vmatmul.bf16.gmra.mxu0 %v2571
    %v2659 = vpop.f32.mrf.mxu0
    %v2660 = vadd.f32 %v790, %v2659
    %v2661 = vpop.f32.mrf.mxu0
    %2662 = vdwg.mxu0
    %2663 = vmatpush.bf16.msra.mxu0 %v1055
    %2664 = vmatpush.bf16.msra.mxu0 %v1047
    %2665 = vmatpush.bf16.msra.mxu0 %v1039
    %2666 = vmatpush.bf16.msra.mxu0 %v1031
    %2667 = vmatpush.bf16.msra.mxu0 %v1023
    %2668 = vmatpush.bf16.msra.mxu0 %v1015
    %2669 = vmatpush.bf16.msra.mxu0 %v1007
    %2670 = vmatpush.bf16.msra.mxu0 %v999
    %2671 = vmatmul.bf16.gmra.mxu0 %v2571
    %v2672 = vpop.f32.mrf.mxu0
    %v2673 = vadd.f32 %v791, %v2672
    %v2674 = vpop.f32.mrf.mxu0
    %2675 = vdwg.mxu0
    %v2676 = vadd.f32 %v2450, %v2582
    %v2677 = vadd.f32 %v2451, %v2595
    %v2678 = vadd.f32 %v2452, %v2608
    %v2679 = vadd.f32 %v2453, %v2621
    %v2680 = vadd.f32 %v2454, %v2634
    %v2681 = vadd.f32 %v2455, %v2647
    %v2682 = vadd.f32 %v2456, %v2660
    %v2683 = vadd.f32 %v2457, %v2673
    %2684 = vst [vmem:[#allocation10] sm:$0xff] %v2676
    %2685 = vst [vmem:[#allocation10 + $0x8] sm:$0xff] %v2677
    %2686 = vst [vmem:[#allocation10 + $0x10] sm:$0xff] %v2678
    %2687 = vst [vmem:[#allocation10 + $0x18] sm:$0xff] %v2679
    %2688 = vst [vmem:[#allocation10 + $0x20] sm:$0xff] %v2680
    %2689 = vst [vmem:[#allocation10 + $0x28] sm:$0xff] %v2681
    %2690 = vst [vmem:[#allocation10 + $0x30] sm:$0xff] %v2682
    %2691 = vst [vmem:[#allocation10 + $0x38] sm:$0xff] %v2683
    %v2692 = vld [vmem:[#allocation10] sm:$0xff]
    %v2693 = vld [vmem:[#allocation10 + $0x8] sm:$0xff]
    %v2694 = vld [vmem:[#allocation10 + $0x10] sm:$0xff]
    %v2695 = vld [vmem:[#allocation10 + $0x18] sm:$0xff]
    %v2696 = vld [vmem:[#allocation10 + $0x20] sm:$0xff]
    %v2697 = vld [vmem:[#allocation10 + $0x28] sm:$0xff]
    %v2698 = vld [vmem:[#allocation10 + $0x30] sm:$0xff]
    %v2699 = vld [vmem:[#allocation10 + $0x38] sm:$0xff]
    %v2700 = vpack.c.bf16 %v2692, %v2692
    %v2701 = vpack.c.bf16 %v2693, %v2693
    %v2702 = vpack.c.bf16 %v2694, %v2694
    %v2703 = vpack.c.bf16 %v2695, %v2695
    %v2704 = vpack.c.bf16 %v2696, %v2696
    %v2705 = vpack.c.bf16 %v2697, %v2697
    %v2706 = vpack.c.bf16 %v2698, %v2698
    %v2707 = vpack.c.bf16 %v2699, %v2699
    %2708 = vmatpush.bf16.msra.mxu0 %v556
    %2709 = vmatpush.bf16.msra.mxu0 %v555
    %2710 = vmatpush.bf16.msra.mxu0 %v554
    %2711 = vmatpush.bf16.msra.mxu0 %v553
    %2712 = vmatpush.bf16.msra.mxu0 %v552
    %2713 = vmatpush.bf16.msra.mxu0 %v551
    %2714 = vmatpush.bf16.msra.mxu0 %v550
    %2715 = vmatpush.bf16.msra.mxu0 %v549
    %2716 = vmatmul.bf16.gmra.mxu0 %v2700
    %v2717 = vpop.f32.mrf.mxu0
    %v2718 = vadd.f32 %v291, %v2717
    %v2719 = vpop.f32.mrf.mxu0
    %2720 = vdwg.mxu0
    %2721 = vmatpush.bf16.msra.mxu0 %v564
    %2722 = vmatpush.bf16.msra.mxu0 %v563
    %2723 = vmatpush.bf16.msra.mxu0 %v562
    %2724 = vmatpush.bf16.msra.mxu0 %v561
    %2725 = vmatpush.bf16.msra.mxu0 %v560
    %2726 = vmatpush.bf16.msra.mxu0 %v559
    %2727 = vmatpush.bf16.msra.mxu0 %v558
    %2728 = vmatpush.bf16.msra.mxu0 %v557
    %2729 = vmatmul.bf16.gmra.mxu0 %v2701
    %v2730 = vpop.f32.mrf.mxu0
    %v2731 = vadd.f32 %v2718, %v2730
    %v2732 = vpop.f32.mrf.mxu0
    %2733 = vdwg.mxu0
    %2734 = vmatpush.bf16.msra.mxu0 %v572
    %2735 = vmatpush.bf16.msra.mxu0 %v571
    %2736 = vmatpush.bf16.msra.mxu0 %v570
    %2737 = vmatpush.bf16.msra.mxu0 %v569
    %2738 = vmatpush.bf16.msra.mxu0 %v568
    %2739 = vmatpush.bf16.msra.mxu0 %v567
    %2740 = vmatpush.bf16.msra.mxu0 %v566
    %2741 = vmatpush.bf16.msra.mxu0 %v565
    %2742 = vmatmul.bf16.gmra.mxu0 %v2702
    %v2743 = vpop.f32.mrf.mxu0
    %v2744 = vadd.f32 %v2731, %v2743
    %v2745 = vpop.f32.mrf.mxu0
    %2746 = vdwg.mxu0
    %2747 = vmatpush.bf16.msra.mxu0 %v580
    %2748 = vmatpush.bf16.msra.mxu0 %v579
    %2749 = vmatpush.bf16.msra.mxu0 %v578
    %2750 = vmatpush.bf16.msra.mxu0 %v577
    %2751 = vmatpush.bf16.msra.mxu0 %v576
    %2752 = vmatpush.bf16.msra.mxu0 %v575
    %2753 = vmatpush.bf16.msra.mxu0 %v574
    %2754 = vmatpush.bf16.msra.mxu0 %v573
    %2755 = vmatmul.bf16.gmra.mxu0 %v2703
    %v2756 = vpop.f32.mrf.mxu0
    %v2757 = vadd.f32 %v2744, %v2756
    %v2758 = vpop.f32.mrf.mxu0
    %2759 = vdwg.mxu0
    %2760 = vmatpush.bf16.msra.mxu0 %v588
    %2761 = vmatpush.bf16.msra.mxu0 %v587
    %2762 = vmatpush.bf16.msra.mxu0 %v586
    %2763 = vmatpush.bf16.msra.mxu0 %v585
    %2764 = vmatpush.bf16.msra.mxu0 %v584
    %2765 = vmatpush.bf16.msra.mxu0 %v583
    %2766 = vmatpush.bf16.msra.mxu0 %v582
    %2767 = vmatpush.bf16.msra.mxu0 %v581
    %2768 = vmatmul.bf16.gmra.mxu0 %v2704
    %v2769 = vpop.f32.mrf.mxu0
    %v2770 = vadd.f32 %v2757, %v2769
    %v2771 = vpop.f32.mrf.mxu0
    %2772 = vdwg.mxu0
    %2773 = vmatpush.bf16.msra.mxu0 %v596
    %2774 = vmatpush.bf16.msra.mxu0 %v595
    %2775 = vmatpush.bf16.msra.mxu0 %v594
    %2776 = vmatpush.bf16.msra.mxu0 %v593
    %2777 = vmatpush.bf16.msra.mxu0 %v592
    %2778 = vmatpush.bf16.msra.mxu0 %v591
    %2779 = vmatpush.bf16.msra.mxu0 %v590
    %2780 = vmatpush.bf16.msra.mxu0 %v589
    %2781 = vmatmul.bf16.gmra.mxu0 %v2705
    %v2782 = vpop.f32.mrf.mxu0
    %v2783 = vadd.f32 %v2770, %v2782
    %v2784 = vpop.f32.mrf.mxu0
    %2785 = vdwg.mxu0
    %2786 = vmatpush.bf16.msra.mxu0 %v604
    %2787 = vmatpush.bf16.msra.mxu0 %v603
    %2788 = vmatpush.bf16.msra.mxu0 %v602
    %2789 = vmatpush.bf16.msra.mxu0 %v601
    %2790 = vmatpush.bf16.msra.mxu0 %v600
    %2791 = vmatpush.bf16.msra.mxu0 %v599
    %2792 = vmatpush.bf16.msra.mxu0 %v598
    %2793 = vmatpush.bf16.msra.mxu0 %v597
    %2794 = vmatmul.bf16.gmra.mxu0 %v2706
    %v2795 = vpop.f32.mrf.mxu0
    %v2796 = vadd.f32 %v2783, %v2795
    %v2797 = vpop.f32.mrf.mxu0
    %2798 = vdwg.mxu0
    %2799 = vmatpush.bf16.msra.mxu0 %v612
    %2800 = vmatpush.bf16.msra.mxu0 %v611
    %2801 = vmatpush.bf16.msra.mxu0 %v610
    %2802 = vmatpush.bf16.msra.mxu0 %v609
    %2803 = vmatpush.bf16.msra.mxu0 %v608
    %2804 = vmatpush.bf16.msra.mxu0 %v607
    %2805 = vmatpush.bf16.msra.mxu0 %v606
    %2806 = vmatpush.bf16.msra.mxu0 %v605
    %2807 = vmatmul.bf16.gmra.mxu0 %v2707
    %v2808 = vpop.f32.mrf.mxu0
    %v2809 = vadd.f32 %v2796, %v2808
    %v2810 = vpop.f32.mrf.mxu0
    %2811 = vdwg.mxu0
    %v2812 = vtanh.pop %v2809
    %v2813 = vpack.c.bf16 %v2812, %v2812
    %2814 = vmatpush.bf16.msra.mxu0 %v1048
    %2815 = vmatpush.bf16.msra.mxu0 %v1040
    %2816 = vmatpush.bf16.msra.mxu0 %v1032
    %2817 = vmatpush.bf16.msra.mxu0 %v1024
    %2818 = vmatpush.bf16.msra.mxu0 %v1016
    %2819 = vmatpush.bf16.msra.mxu0 %v1008
    %2820 = vmatpush.bf16.msra.mxu0 %v1000
    %2821 = vmatpush.bf16.msra.mxu0 %v992
    %2822 = vmatmul.bf16.gmra.mxu0 %v2813
    %v2823 = vpop.f32.mrf.mxu0
    %v2824 = vadd.f32 %v784, %v2823
    %v2825 = vpop.f32.mrf.mxu0
    %2826 = vdwg.mxu0
    %2827 = vmatpush.bf16.msra.mxu0 %v1049
    %2828 = vmatpush.bf16.msra.mxu0 %v1041
    %2829 = vmatpush.bf16.msra.mxu0 %v1033
    %2830 = vmatpush.bf16.msra.mxu0 %v1025
    %2831 = vmatpush.bf16.msra.mxu0 %v1017
    %2832 = vmatpush.bf16.msra.mxu0 %v1009
    %2833 = vmatpush.bf16.msra.mxu0 %v1001
    %2834 = vmatpush.bf16.msra.mxu0 %v993
    %2835 = vmatmul.bf16.gmra.mxu0 %v2813
    %v2836 = vpop.f32.mrf.mxu0
    %v2837 = vadd.f32 %v785, %v2836
    %v2838 = vpop.f32.mrf.mxu0
    %2839 = vdwg.mxu0
    %2840 = vmatpush.bf16.msra.mxu0 %v1050
    %2841 = vmatpush.bf16.msra.mxu0 %v1042
    %2842 = vmatpush.bf16.msra.mxu0 %v1034
    %2843 = vmatpush.bf16.msra.mxu0 %v1026
    %2844 = vmatpush.bf16.msra.mxu0 %v1018
    %2845 = vmatpush.bf16.msra.mxu0 %v1010
    %2846 = vmatpush.bf16.msra.mxu0 %v1002
    %2847 = vmatpush.bf16.msra.mxu0 %v994
    %2848 = vmatmul.bf16.gmra.mxu0 %v2813
    %v2849 = vpop.f32.mrf.mxu0
    %v2850 = vadd.f32 %v786, %v2849
    %v2851 = vpop.f32.mrf.mxu0
    %2852 = vdwg.mxu0
    %2853 = vmatpush.bf16.msra.mxu0 %v1051
    %2854 = vmatpush.bf16.msra.mxu0 %v1043
    %2855 = vmatpush.bf16.msra.mxu0 %v1035
    %2856 = vmatpush.bf16.msra.mxu0 %v1027
    %2857 = vmatpush.bf16.msra.mxu0 %v1019
    %2858 = vmatpush.bf16.msra.mxu0 %v1011
    %2859 = vmatpush.bf16.msra.mxu0 %v1003
    %2860 = vmatpush.bf16.msra.mxu0 %v995
    %2861 = vmatmul.bf16.gmra.mxu0 %v2813
    %v2862 = vpop.f32.mrf.mxu0
    %v2863 = vadd.f32 %v787, %v2862
    %v2864 = vpop.f32.mrf.mxu0
    %2865 = vdwg.mxu0
    %2866 = vmatpush.bf16.msra.mxu0 %v1052
    %2867 = vmatpush.bf16.msra.mxu0 %v1044
    %2868 = vmatpush.bf16.msra.mxu0 %v1036
    %2869 = vmatpush.bf16.msra.mxu0 %v1028
    %2870 = vmatpush.bf16.msra.mxu0 %v1020
    %2871 = vmatpush.bf16.msra.mxu0 %v1012
    %2872 = vmatpush.bf16.msra.mxu0 %v1004
    %2873 = vmatpush.bf16.msra.mxu0 %v996
    %2874 = vmatmul.bf16.gmra.mxu0 %v2813
    %v2875 = vpop.f32.mrf.mxu0
    %v2876 = vadd.f32 %v788, %v2875
    %v2877 = vpop.f32.mrf.mxu0
    %2878 = vdwg.mxu0
    %2879 = vmatpush.bf16.msra.mxu0 %v1053
    %2880 = vmatpush.bf16.msra.mxu0 %v1045
    %2881 = vmatpush.bf16.msra.mxu0 %v1037
    %2882 = vmatpush.bf16.msra.mxu0 %v1029
    %2883 = vmatpush.bf16.msra.mxu0 %v1021
    %2884 = vmatpush.bf16.msra.mxu0 %v1013
    %2885 = vmatpush.bf16.msra.mxu0 %v1005
    %2886 = vmatpush.bf16.msra.mxu0 %v997
    %2887 = vmatmul.bf16.gmra.mxu0 %v2813
    %v2888 = vpop.f32.mrf.mxu0
    %v2889 = vadd.f32 %v789, %v2888
    %v2890 = vpop.f32.mrf.mxu0
    %2891 = vdwg.mxu0
    %2892 = vmatpush.bf16.msra.mxu0 %v1054
    %2893 = vmatpush.bf16.msra.mxu0 %v1046
    %2894 = vmatpush.bf16.msra.mxu0 %v1038
    %2895 = vmatpush.bf16.msra.mxu0 %v1030
    %2896 = vmatpush.bf16.msra.mxu0 %v1022
    %2897 = vmatpush.bf16.msra.mxu0 %v1014
    %2898 = vmatpush.bf16.msra.mxu0 %v1006
    %2899 = vmatpush.bf16.msra.mxu0 %v998
    %2900 = vmatmul.bf16.gmra.mxu0 %v2813
    %v2901 = vpop.f32.mrf.mxu0
    %v2902 = vadd.f32 %v790, %v2901
    %v2903 = vpop.f32.mrf.mxu0
    %2904 = vdwg.mxu0
    %2905 = vmatpush.bf16.msra.mxu0 %v1055
    %2906 = vmatpush.bf16.msra.mxu0 %v1047
    %2907 = vmatpush.bf16.msra.mxu0 %v1039
    %2908 = vmatpush.bf16.msra.mxu0 %v1031
    %2909 = vmatpush.bf16.msra.mxu0 %v1023
    %2910 = vmatpush.bf16.msra.mxu0 %v1015
    %2911 = vmatpush.bf16.msra.mxu0 %v1007
    %2912 = vmatpush.bf16.msra.mxu0 %v999
    %2913 = vmatmul.bf16.gmra.mxu0 %v2813
    %v2914 = vpop.f32.mrf.mxu0
    %v2915 = vadd.f32 %v791, %v2914
    %v2916 = vpop.f32.mrf.mxu0
    %2917 = vdwg.mxu0
    %v2918 = vadd.f32 %v2692, %v2824
    %v2919 = vadd.f32 %v2693, %v2837
    %v2920 = vadd.f32 %v2694, %v2850
    %v2921 = vadd.f32 %v2695, %v2863
    %v2922 = vadd.f32 %v2696, %v2876
    %v2923 = vadd.f32 %v2697, %v2889
    %v2924 = vadd.f32 %v2698, %v2902
    %v2925 = vadd.f32 %v2699, %v2915
    %2926 = vst [vmem:[#allocation10] sm:$0xff] %v2918
    %2927 = vst [vmem:[#allocation10 + $0x8] sm:$0xff] %v2919
    %2928 = vst [vmem:[#allocation10 + $0x10] sm:$0xff] %v2920
    %2929 = vst [vmem:[#allocation10 + $0x18] sm:$0xff] %v2921
    %2930 = vst [vmem:[#allocation10 + $0x20] sm:$0xff] %v2922
    %2931 = vst [vmem:[#allocation10 + $0x28] sm:$0xff] %v2923
    %2932 = vst [vmem:[#allocation10 + $0x30] sm:$0xff] %v2924
    %2933 = vst [vmem:[#allocation10 + $0x38] sm:$0xff] %v2925
    // Predicated region
    $region38: #{tpu_custom_call.1} parent=1 // pred_check
      _
    $region39: #{tpu_custom_call.1} parent=1 // pred_check_branch
      %2935 = sbr.rel (0) target = $region41
    $region40: #{tpu_custom_call.1} parent=1 // pred_region
      %2937 = vsyncadd [#allocation4], 0
      %s2939 = sshll.u32 [#allocation10], 4
      %s2940 = int_to_ptr.vmem [resolvable:$true] %s2939
      %s2941 = sshll.u32 %s5, 4
      %s2942 = int_to_ptr.hbm [resolvable:$true] %s2941
      %2944 = dma.vmem_to_hbm [thread:$0]  %s2940, 1024, %s2942, [#allocation4]
    $region41: #{tpu_custom_call.1} parent=1 // pred_fallthru
      _
    // Predicated region
    $region42: #{tpu_custom_call.1} parent=1 // pred_check
      _
    $region43: #{tpu_custom_call.1} parent=1 // pred_check_branch
      %2946 = sbr.rel (0) target = $region45
    $region44: #{tpu_custom_call.1} parent=1 // pred_region
      %2948 = dma.done [#allocation4], 1024
    $region45: #{tpu_custom_call.1} parent=1 // pred_fallthru
      _
    %2949 = vsyncpa [#allocation3], 1
    %2950 = vsyncpa [#allocation6], 1
    %2951 = vsyncpa [#allocation9], 1
    %2952 = vsyncpa [#allocation4], 1

</llo_original>
